<compile_context>
chip_gen: v7x
topology: tpu7x:2x2x1
jax: 0.10.0
libtpu: 0.0.40
codegen_flags: <defaults>
</compile_context>

<pallas_src>
import functools

import jax
import jax.numpy as jnp
from jax import lax
from jax.experimental import pallas as pl
from jax.experimental.pallas import tpu as pltpu
import numpy as np


_N_NEWTON = 12


def _rmsd_kernel(x_ref, y_ref, n_ref, out_ref, acc_ref):
    """One (batch-block, atom-tile) grid step.

    x_ref, y_ref : VMEM (3, BBLK, TA) f32   coords in xyz-plane layout
    n_ref        : VMEM (BBLK, 1) int32     num_atoms per item
    out_ref      : VMEM (BBLK, 128) f32     lane-dense MSD output
    acc_ref      : VMEM (BBLK, 24) f32      running sufficient statistics:
        [0:9]   P_ab = sum (x_a - x0_a)(y_b - y0_b)   (a-major)
        [9]     Q    = sum |x - x0|^2 + |y - y0|^2
        [10:13] Sx_a = sum (x_a - x0_a)
        [13:16] Sy_a = sum (y_a - y0_a)
        [16:19] x0_a   (atom-0 shift, stored on the first atom tile)
        [19:22] y0_a
    """
    a_idx = pl.program_id(1)
    _, bblk, ta = x_ref.shape

    x = x_ref[...]                                   # (3, BBLK, TA)
    y = y_ref[...]
    n = n_ref[...]                                   # (BBLK, 1) int32

    # --- init: zero the accumulator and stash the atom-0 reference point.
    # The centered statistics are shift-invariant, so pre-shifting by atom 0
    # keeps the f32 sums well conditioned for far-from-origin coordinates.
    @pl.when(a_idx == 0)
    def _init():
        acc_ref[:, 0:16] = jnp.zeros((bblk, 16), jnp.float32)
        acc_ref[:, 16:19] = jnp.concatenate(
            [x[c, :, 0:1] for c in range(3)], axis=-1)
        acc_ref[:, 19:22] = jnp.concatenate(
            [y[c, :, 0:1] for c in range(3)], axis=-1)

    x0 = acc_ref[:, 16:19]                           # (BBLK, 3)
    y0 = acc_ref[:, 19:22]

    atom = lax.broadcasted_iota(jnp.int32, (bblk, ta), 1) + a_idx * ta
    mask = atom < n                                  # (BBLK, TA) bool

    # Centered-ish (atom-0-shifted), masked coords; computed once and reused
    # by every reduction below (no xm/ym + xc/yc double materialization).
    dx = [jnp.where(mask, x[c] - x0[:, c:c + 1], 0.0) for c in range(3)]
    dy = [jnp.where(mask, y[c] - y0[:, c:c + 1], 0.0) for c in range(3)]

    cols = []
    for a in range(3):
        for b in range(3):
            cols.append(jnp.sum(dx[a] * dy[b], axis=-1, keepdims=True))
    q = (dx[0] * dx[0] + dx[1] * dx[1] + dx[2] * dx[2]
         + dy[0] * dy[0] + dy[1] * dy[1] + dy[2] * dy[2])
    cols.append(jnp.sum(q, axis=-1, keepdims=True))
    for c in range(3):
        cols.append(jnp.sum(dx[c], axis=-1, keepdims=True))
    for c in range(3):
        cols.append(jnp.sum(dy[c], axis=-1, keepdims=True))

    acc_ref[:, 0:16] = acc_ref[:, 0:16] + jnp.concatenate(cols, axis=-1)

    # --- fused epilogue on the last atom tile: R, G, QCP quartic, Newton, msd.
    @pl.when(a_idx == pl.num_programs(1) - 1)
    def _epilogue():
        s = acc_ref[:, 0:16]
        nf = jnp.maximum(n.astype(jnp.float32), 1.0)
        r = pl.reciprocal(nf, approx=True)
        r = r * (2.0 - nf * r)                       # one NR step -> ~f32 exact
        inv_n = jnp.where(n > 0, r, 0.0)             # (BBLK, 1)

        P = [s[:, k:k + 1] for k in range(9)]
        Q = s[:, 9:10]
        Sx = [s[:, 10 + c:11 + c] for c in range(3)]
        Sy = [s[:, 13 + c:14 + c] for c in range(3)]

        # Centered correlation matrix and G (shift-invariant forms).
        R = [P[3 * a + b] - Sx[a] * Sy[b] * inv_n
             for a in range(3) for b in range(3)]
        G = Q - (Sx[0] * Sx[0] + Sx[1] * Sx[1] + Sx[2] * Sx[2]
                 + Sy[0] * Sy[0] + Sy[1] * Sy[1] + Sy[2] * Sy[2]) * inv_n

        # Normalize by G/2: solve the quartic for mu = lambda / (G/2) so every
        # coefficient is O(1) in f32 (mu_max <= 1, start Newton at mu0 = 1).
        g_safe = jnp.maximum(G, 1e-30)
        ir = pl.reciprocal(g_safe, approx=True)
        ir = ir * (2.0 - g_safe * ir)
        inv_s = 2.0 * ir

        Sxx, Sxy, Sxz, Syx, Syy, Syz, Szx, Szy, Szz = [v * inv_s for v in R]

        c2 = -2.0 * (Sxx * Sxx + Sxy * Sxy + Sxz * Sxz
                     + Syx * Syx + Syy * Syy + Syz * Syz
                     + Szx * Szx + Szy * Szy + Szz * Szz)
        detR = (Sxx * (Syy * Szz - Syz * Szy)
                - Sxy * (Syx * Szz - Syz * Szx)
                + Sxz * (Syx * Szy - Syy * Szx))
        c1 = -8.0 * detR

        # 4x4 Kearsley key matrix (symmetric) built from R, analytically.
        K00 = Sxx + Syy + Szz
        K01 = Syz - Szy
        K02 = Szx - Sxz
        K03 = Sxy - Syx
        K11 = Sxx - Syy - Szz
        K12 = Sxy + Syx
        K13 = Szx + Sxz
        K22 = -Sxx + Syy - Szz
        K23 = Syz + Szy
        K33 = -Sxx - Syy + Szz

        def det3(a, b, c, d, e, f, g, h, i):
            return a * (e * i - f * h) - b * (d * i - f * g) + c * (d * h - e * g)

        c0 = (K00 * det3(K11, K12, K13, K12, K22, K23, K13, K23, K33)
              - K01 * det3(K01, K12, K13, K02, K22, K23, K03, K23, K33)
              + K02 * det3(K01, K11, K13, K02, K12, K23, K03, K13, K33)
              - K03 * det3(K01, K11, K12, K02, K12, K22, K03, K13, K23))

        def newton(_, mu):
            mu2 = mu * mu
            b_ = (mu2 + c2) * mu
            a_ = b_ + c1
            num = a_ * mu + c0                        # P(mu)
            den = 2.0 * mu2 * mu + b_ + a_            # P'(mu)
            den = jnp.where(jnp.abs(den) > 1e-8, den,
                            jnp.where(den >= 0.0, 1e-8, -1e-8))
            return mu - num / den

        mu = lax.fori_loop(0, _N_NEWTON, newton, jnp.ones_like(G), unroll=True)

        msd = jnp.maximum(G * (1.0 - mu), 0.0) * inv_n      # (BBLK, 1)
        out_ref[...] = jnp.broadcast_to(msd, out_ref.shape)  # lane-dense store


def _round_up(v, m):
    return -(-v // m) * m


@functools.partial(jax.jit, static_argnames=("bblk", "ta"))
def coords2rmsd(input_flat, target_flat, num_atoms, bblk=None, ta=None):
    """Squared minimal RMSD (MSD) per batch item, float32, shape (B,)."""
    B, L = input_flat.shape
    assert L % 3 == 0
    A = L // 3
    Apad = _round_up(max(A, 1), 128)

    # Atom tile: cap the reduction tile so VMEM stays bounded for huge
    # molecules (mandatory on v7x's 64 MiB VMEM); re-pad Apad to a multiple.
    if ta is None:
        n_atiles = max(1, -(-Apad // 2048))
        ta = _round_up(-(-Apad // n_atiles), 128)
    assert ta % 128 == 0
    Apad = _round_up(Apad, ta)
    n_atiles = Apad // ta

    # Batch block: ~0.5-2 MiB per coord block, but keep >=2 batch blocks when
    # possible so v7x's two TensorCores can split the "parallel" axis.
    if bblk is None:
        bblk = max(8, min(1024, (2 * 1024 * 1024) // (3 * ta * 4) // 8 * 8))
        b_need = _round_up(B, 8)
        if bblk >= b_need and B > 8:
            bblk = _round_up(-(-B // 2), 8)
        bblk = min(bblk, b_need)
    assert bblk % 8 == 0
    Bpad = _round_up(B, bblk)

    def prep(c):
        # (B, 3A) atom-major -> xyz-plane layout (3, Bpad, Apad).
        # allow_input_fusion (below) lets XLA fuse this producer into the
        # pallas_call operand fetch instead of materializing a 2nd HBM copy.
        c = c.astype(jnp.float32).reshape(B, A, 3)
        c = jnp.transpose(c, (2, 0, 1))
        return jnp.pad(c, ((0, 0), (0, Bpad - B), (0, Apad - A)))

    x = prep(input_flat)
    y = prep(target_flat)
    n_col = jnp.pad(num_atoms.astype(jnp.int32), (0, Bpad - B)).reshape(Bpad, 1)

    out = pl.pallas_call(
        _rmsd_kernel,
        out_shape=jax.ShapeDtypeStruct((Bpad, 128), jnp.float32),
        grid=(Bpad // bblk, n_atiles),
        in_specs=[
            pl.BlockSpec((3, bblk, ta), lambda b, a: (0, b, a)),
            pl.BlockSpec((3, bblk, ta), lambda b, a: (0, b, a)),
            pl.BlockSpec((bblk, 1), lambda b, a: (b, 0)),
        ],
        out_specs=pl.BlockSpec((bblk, 128), lambda b, a: (b, 0)),
        scratch_shapes=[pltpu.VMEM((bblk, 24), jnp.float32)],
        compiler_params=pltpu.CompilerParams(
            dimension_semantics=("parallel", "arbitrary"),
            vmem_limit_bytes=32 * 1024 * 1024,
            allow_input_fusion=[True, True, False],
        ),
    )(x, y, n_col)

    return out[:B, 0]


def _reference_msd(inp, tgt, num_atoms):
    """Independent Kabsch/SVD reference in float64 numpy."""
    inp = np.asarray(inp, dtype=np.float64)
    tgt = np.asarray(tgt, dtype=np.float64)
    out = []
    for b in range(inp.shape[0]):
        nb = int(num_atoms[b])
        xb = inp[b].reshape(-1, 3)[:nb]
        yb = tgt[b].reshape(-1, 3)[:nb]
        xb = xb - xb.mean(axis=0)
        yb = yb - yb.mean(axis=0)
        Rm = xb.T @ yb
        U, S, Vt = np.linalg.svd(Rm)
        d = np.sign(np.linalg.det(U @ Vt))
        lam = S[0] + S[1] + d * S[2]
        out.append(((xb * xb).sum() + (yb * yb).sum() - 2.0 * lam) / nb)
    return np.array(out)


if __name__ == "__main__":
    key = jax.random.PRNGKey(0)

    # Test 1: tiny shapes (single atom tile).
    B, A = 10, 16
    k1, k2 = jax.random.split(key)
    inp = jax.random.normal(k1, (B, 3 * A), dtype=jnp.float32)
    tgt = jax.random.normal(k2, (B, 3 * A), dtype=jnp.float32)
    num_atoms = jnp.array([16, 12, 9, 16, 7, 15, 11, 16, 13, 5], dtype=jnp.int32)
    out = jax.block_until_ready(coords2rmsd(inp, tgt, num_atoms))
    ref = _reference_msd(inp, tgt, num_atoms)
    np.testing.assert_allclose(np.asarray(out), ref, rtol=3e-3, atol=3e-3)

    # Test 2: exercises the atom-axis reduction grid (ta=128 -> 2 atom tiles),
    # ragged num_atoms and a large common coordinate offset (atom-0 pre-shift).
    B2, A2 = 12, 200
    k3, k4, k5 = jax.random.split(k2, 3)
    inp2 = jax.random.normal(k3, (B2, 3 * A2), dtype=jnp.float32) + 50.0
    tgt2 = jax.random.normal(k4, (B2, 3 * A2), dtype=jnp.float32) + 50.0
    num_atoms2 = jax.random.randint(k5, (B2,), 1, A2 + 1).astype(jnp.int32)
    out2 = jax.block_until_ready(coords2rmsd(inp2, tgt2, num_atoms2, ta=128))
    ref2 = _reference_msd(inp2, tgt2, num_atoms2)
    np.testing.assert_allclose(np.asarray(out2), ref2, rtol=3e-3, atol=3e-3)

    print("KERNEL_OK")
</pallas_src>

<mosaic_0001>
module attributes {stable_mosaic.version = 11 : i64} {
  func.func @_rmsd_kernel(%arg0: i32, %arg1: i32, %arg2: memref<3x8x128xf32, #tpu.memory_space<vmem>>, %arg3: memref<3x8x128xf32, #tpu.memory_space<vmem>>, %arg4: memref<8x1xi32, #tpu.memory_space<vmem>>, %arg5: memref<8x128xf32, #tpu.memory_space<vmem>>, %arg6: memref<8x24xf32, #tpu.memory_space<vmem>>) attributes {dimension_semantics = [#tpu.dimension_semantics<parallel>, #tpu.dimension_semantics<arbitrary>], iteration_bounds = array<i64: 2, 1>, scalar_prefetch = 0 : i64, scratch_operands = 1 : i64, tpu.core_type = #tpu.core_type<tc>, window_params = [{transform_indices = @transform_0, window_bounds = array<i64: 3, 8, 128>}, {transform_indices = @transform_1, window_bounds = array<i64: 3, 8, 128>}, {transform_indices = @transform_2, window_bounds = array<i64: 8, 1>}, {transform_indices = @transform_3, window_bounds = array<i64: 8, 128>}]} {
    %c0 = arith.constant 0 : index
    %c0_0 = arith.constant 0 : index
    %c0_1 = arith.constant 0 : index
    %0 = vector.load %arg2[%c0, %c0_0, %c0_1] : memref<3x8x128xf32, #tpu.memory_space<vmem>>, vector<3x8x128xf32>
    %c0_2 = arith.constant 0 : index
    %c0_3 = arith.constant 0 : index
    %c0_4 = arith.constant 0 : index
    %1 = vector.load %arg3[%c0_2, %c0_3, %c0_4] : memref<3x8x128xf32, #tpu.memory_space<vmem>>, vector<3x8x128xf32>
    %c0_5 = arith.constant 0 : index
    %c0_6 = arith.constant 0 : index
    %2 = vector.load %arg4[%c0_5, %c0_6] : memref<8x1xi32, #tpu.memory_space<vmem>>, vector<8x1xi32>
    %c0_i32 = arith.constant 0 : i32
    %3 = arith.cmpi eq, %arg1, %c0_i32 : i32
    %4 = arith.extui %3 : i1 to i32
    %c0_i32_7 = arith.constant 0 : i32
    %5 = arith.cmpi ne, %4, %c0_i32_7 : i32
    scf.if %5 {
      %cst_37 = arith.constant 0.000000e+00 : f32
      %115 = vector.broadcast %cst_37 : f32 to vector<8x16xf32>
      %c0_38 = arith.constant 0 : index
      %c0_39 = arith.constant 0 : index
      %116 = vector.load %arg6[%c0_38, %c0_39] : memref<8x24xf32, #tpu.memory_space<vmem>>, vector<8x16xf32>
      tpu.vector_store %arg6[%c0_38, %c0_39], %115 {strides = array<i32>} : memref<8x24xf32, #tpu.memory_space<vmem>>, vector<8x16xf32>,
      %117 = vector.extract_strided_slice %0 {offsets = [0, 0, 0], sizes = [1, 8, 1], strides = [1, 1, 1]} : vector<3x8x128xf32> to vector<1x8x1xf32>
      %118 = vector.shape_cast %117 : vector<1x8x1xf32> to vector<8x1xf32>
      %119 = vector.extract_strided_slice %0 {offsets = [1, 0, 0], sizes = [1, 8, 1], strides = [1, 1, 1]} : vector<3x8x128xf32> to vector<1x8x1xf32>
      %120 = vector.shape_cast %119 : vector<1x8x1xf32> to vector<8x1xf32>
      %121 = vector.extract_strided_slice %0 {offsets = [2, 0, 0], sizes = [1, 8, 1], strides = [1, 1, 1]} : vector<3x8x128xf32> to vector<1x8x1xf32>
      %122 = vector.shape_cast %121 : vector<1x8x1xf32> to vector<8x1xf32>
      %123 = tpu.concatenate %118, %120, %122 in 1 : vector<8x1xf32>, vector<8x1xf32>, vector<8x1xf32> -> vector<8x3xf32>
      %c0_40 = arith.constant 0 : index
      %c16_41 = arith.constant 16 : index
      %124 = vector.load %arg6[%c0_40, %c16_41] : memref<8x24xf32, #tpu.memory_space<vmem>>, vector<8x3xf32>
      tpu.vector_store %arg6[%c0_40, %c16_41], %123 {strides = array<i32>} : memref<8x24xf32, #tpu.memory_space<vmem>>, vector<8x3xf32>,
      %125 = vector.extract_strided_slice %1 {offsets = [0, 0, 0], sizes = [1, 8, 1], strides = [1, 1, 1]} : vector<3x8x128xf32> to vector<1x8x1xf32>
      %126 = vector.shape_cast %125 : vector<1x8x1xf32> to vector<8x1xf32>
      %127 = vector.extract_strided_slice %1 {offsets = [1, 0, 0], sizes = [1, 8, 1], strides = [1, 1, 1]} : vector<3x8x128xf32> to vector<1x8x1xf32>
      %128 = vector.shape_cast %127 : vector<1x8x1xf32> to vector<8x1xf32>
      %129 = vector.extract_strided_slice %1 {offsets = [2, 0, 0], sizes = [1, 8, 1], strides = [1, 1, 1]} : vector<3x8x128xf32> to vector<1x8x1xf32>
      %130 = vector.shape_cast %129 : vector<1x8x1xf32> to vector<8x1xf32>
      %131 = tpu.concatenate %126, %128, %130 in 1 : vector<8x1xf32>, vector<8x1xf32>, vector<8x1xf32> -> vector<8x3xf32>
      %c0_42 = arith.constant 0 : index
      %c19_43 = arith.constant 19 : index
      %132 = vector.load %arg6[%c0_42, %c19_43] : memref<8x24xf32, #tpu.memory_space<vmem>>, vector<8x3xf32>
      tpu.vector_store %arg6[%c0_42, %c19_43], %131 {strides = array<i32>} : memref<8x24xf32, #tpu.memory_space<vmem>>, vector<8x3xf32>,
    } else {
    }
    %c0_8 = arith.constant 0 : index
    %c16 = arith.constant 16 : index
    %6 = vector.load %arg6[%c0_8, %c16] : memref<8x24xf32, #tpu.memory_space<vmem>>, vector<8x3xf32>
    %c0_9 = arith.constant 0 : index
    %c19 = arith.constant 19 : index
    %7 = vector.load %arg6[%c0_9, %c19] : memref<8x24xf32, #tpu.memory_space<vmem>>, vector<8x3xf32>
    %8 = tpu.iota {dimensions = array<i32: 1>} : vector<8x128xi32>
    %c128_i32 = arith.constant 128 : i32
    %9 = arith.muli %arg1, %c128_i32 : i32
    %10 = vector.broadcast %9 : i32 to vector<8x128xi32>
    %11 = arith.addi %8, %10 : vector<8x128xi32>
    %12 = vector.broadcast %2 : vector<8x1xi32> to vector<8x128xi32>
    %13 = arith.cmpi slt, %11, %12 : vector<8x128xi32>
    %14 = vector.extract_strided_slice %0 {offsets = [0, 0, 0], sizes = [1, 8, 128], strides = [1, 1, 1]} : vector<3x8x128xf32> to vector<1x8x128xf32>
    %15 = vector.shape_cast %14 : vector<1x8x128xf32> to vector<8x128xf32>
    %16 = vector.extract_strided_slice %6 {offsets = [0, 0], sizes = [8, 1], strides = [1, 1]} : vector<8x3xf32> to vector<8x1xf32>
    %17 = vector.broadcast %16 : vector<8x1xf32> to vector<8x128xf32>
    %18 = arith.subf %15, %17 : vector<8x128xf32>
    %cst = arith.constant 0.000000e+00 : f32
    %19 = vector.broadcast %cst : f32 to vector<8x128xf32>
    %20 = arith.select %13, %18, %19 : vector<8x128xi1>, vector<8x128xf32>
    %21 = vector.extract_strided_slice %0 {offsets = [1, 0, 0], sizes = [1, 8, 128], strides = [1, 1, 1]} : vector<3x8x128xf32> to vector<1x8x128xf32>
    %22 = vector.shape_cast %21 : vector<1x8x128xf32> to vector<8x128xf32>
    %23 = vector.extract_strided_slice %6 {offsets = [0, 1], sizes = [8, 1], strides = [1, 1]} : vector<8x3xf32> to vector<8x1xf32>
    %24 = vector.broadcast %23 : vector<8x1xf32> to vector<8x128xf32>
    %25 = arith.subf %22, %24 : vector<8x128xf32>
    %cst_10 = arith.constant 0.000000e+00 : f32
    %26 = vector.broadcast %cst_10 : f32 to vector<8x128xf32>
    %27 = arith.select %13, %25, %26 : vector<8x128xi1>, vector<8x128xf32>
    %28 = vector.extract_strided_slice %0 {offsets = [2, 0, 0], sizes = [1, 8, 128], strides = [1, 1, 1]} : vector<3x8x128xf32> to vector<1x8x128xf32>
    %29 = vector.shape_cast %28 : vector<1x8x128xf32> to vector<8x128xf32>
    %30 = vector.extract_strided_slice %6 {offsets = [0, 2], sizes = [8, 1], strides = [1, 1]} : vector<8x3xf32> to vector<8x1xf32>
    %31 = vector.broadcast %30 : vector<8x1xf32> to vector<8x128xf32>
    %32 = arith.subf %29, %31 : vector<8x128xf32>
    %cst_11 = arith.constant 0.000000e+00 : f32
    %33 = vector.broadcast %cst_11 : f32 to vector<8x128xf32>
    %34 = arith.select %13, %32, %33 : vector<8x128xi1>, vector<8x128xf32>
    %35 = vector.extract_strided_slice %1 {offsets = [0, 0, 0], sizes = [1, 8, 128], strides = [1, 1, 1]} : vector<3x8x128xf32> to vector<1x8x128xf32>
    %36 = vector.shape_cast %35 : vector<1x8x128xf32> to vector<8x128xf32>
    %37 = vector.extract_strided_slice %7 {offsets = [0, 0], sizes = [8, 1], strides = [1, 1]} : vector<8x3xf32> to vector<8x1xf32>
    %38 = vector.broadcast %37 : vector<8x1xf32> to vector<8x128xf32>
    %39 = arith.subf %36, %38 : vector<8x128xf32>
    %cst_12 = arith.constant 0.000000e+00 : f32
    %40 = vector.broadcast %cst_12 : f32 to vector<8x128xf32>
    %41 = arith.select %13, %39, %40 : vector<8x128xi1>, vector<8x128xf32>
    %42 = vector.extract_strided_slice %1 {offsets = [1, 0, 0], sizes = [1, 8, 128], strides = [1, 1, 1]} : vector<3x8x128xf32> to vector<1x8x128xf32>
    %43 = vector.shape_cast %42 : vector<1x8x128xf32> to vector<8x128xf32>
    %44 = vector.extract_strided_slice %7 {offsets = [0, 1], sizes = [8, 1], strides = [1, 1]} : vector<8x3xf32> to vector<8x1xf32>
    %45 = vector.broadcast %44 : vector<8x1xf32> to vector<8x128xf32>
    %46 = arith.subf %43, %45 : vector<8x128xf32>
    %cst_13 = arith.constant 0.000000e+00 : f32
    %47 = vector.broadcast %cst_13 : f32 to vector<8x128xf32>
    %48 = arith.select %13, %46, %47 : vector<8x128xi1>, vector<8x128xf32>
    %49 = vector.extract_strided_slice %1 {offsets = [2, 0, 0], sizes = [1, 8, 128], strides = [1, 1, 1]} : vector<3x8x128xf32> to vector<1x8x128xf32>
    %50 = vector.shape_cast %49 : vector<1x8x128xf32> to vector<8x128xf32>
    %51 = vector.extract_strided_slice %7 {offsets = [0, 2], sizes = [8, 1], strides = [1, 1]} : vector<8x3xf32> to vector<8x1xf32>
    %52 = vector.broadcast %51 : vector<8x1xf32> to vector<8x128xf32>
    %53 = arith.subf %50, %52 : vector<8x128xf32>
    %cst_14 = arith.constant 0.000000e+00 : f32
    %54 = vector.broadcast %cst_14 : f32 to vector<8x128xf32>
    %55 = arith.select %13, %53, %54 : vector<8x128xi1>, vector<8x128xf32>
    %56 = arith.mulf %20, %41 : vector<8x128xf32>
    %cst_15 = arith.constant dense<0.000000e+00> : vector<8xf32>
    %57 = vector.multi_reduction <add>, %56, %cst_15 [1] : vector<8x128xf32> to vector<8xf32>
    %58 = vector.shape_cast %57 : vector<8xf32> to vector<8x1xf32>
    %59 = arith.mulf %20, %48 : vector<8x128xf32>
    %cst_16 = arith.constant dense<0.000000e+00> : vector<8xf32>
    %60 = vector.multi_reduction <add>, %59, %cst_16 [1] : vector<8x128xf32> to vector<8xf32>
    %61 = vector.shape_cast %60 : vector<8xf32> to vector<8x1xf32>
    %62 = arith.mulf %20, %55 : vector<8x128xf32>
    %cst_17 = arith.constant dense<0.000000e+00> : vector<8xf32>
    %63 = vector.multi_reduction <add>, %62, %cst_17 [1] : vector<8x128xf32> to vector<8xf32>
    %64 = vector.shape_cast %63 : vector<8xf32> to vector<8x1xf32>
    %65 = arith.mulf %27, %41 : vector<8x128xf32>
    %cst_18 = arith.constant dense<0.000000e+00> : vector<8xf32>
    %66 = vector.multi_reduction <add>, %65, %cst_18 [1] : vector<8x128xf32> to vector<8xf32>
    %67 = vector.shape_cast %66 : vector<8xf32> to vector<8x1xf32>
    %68 = arith.mulf %27, %48 : vector<8x128xf32>
    %cst_19 = arith.constant dense<0.000000e+00> : vector<8xf32>
    %69 = vector.multi_reduction <add>, %68, %cst_19 [1] : vector<8x128xf32> to vector<8xf32>
    %70 = vector.shape_cast %69 : vector<8xf32> to vector<8x1xf32>
    %71 = arith.mulf %27, %55 : vector<8x128xf32>
    %cst_20 = arith.constant dense<0.000000e+00> : vector<8xf32>
    %72 = vector.multi_reduction <add>, %71, %cst_20 [1] : vector<8x128xf32> to vector<8xf32>
    %73 = vector.shape_cast %72 : vector<8xf32> to vector<8x1xf32>
    %74 = arith.mulf %34, %41 : vector<8x128xf32>
    %cst_21 = arith.constant dense<0.000000e+00> : vector<8xf32>
    %75 = vector.multi_reduction <add>, %74, %cst_21 [1] : vector<8x128xf32> to vector<8xf32>
    %76 = vector.shape_cast %75 : vector<8xf32> to vector<8x1xf32>
    %77 = arith.mulf %34, %48 : vector<8x128xf32>
    %cst_22 = arith.constant dense<0.000000e+00> : vector<8xf32>
    %78 = vector.multi_reduction <add>, %77, %cst_22 [1] : vector<8x128xf32> to vector<8xf32>
    %79 = vector.shape_cast %78 : vector<8xf32> to vector<8x1xf32>
    %80 = arith.mulf %34, %55 : vector<8x128xf32>
    %cst_23 = arith.constant dense<0.000000e+00> : vector<8xf32>
    %81 = vector.multi_reduction <add>, %80, %cst_23 [1] : vector<8x128xf32> to vector<8xf32>
    %82 = vector.shape_cast %81 : vector<8xf32> to vector<8x1xf32>
    %83 = arith.mulf %20, %20 : vector<8x128xf32>
    %84 = arith.mulf %27, %27 : vector<8x128xf32>
    %85 = arith.addf %83, %84 : vector<8x128xf32>
    %86 = arith.mulf %34, %34 : vector<8x128xf32>
    %87 = arith.addf %85, %86 : vector<8x128xf32>
    %88 = arith.mulf %41, %41 : vector<8x128xf32>
    %89 = arith.addf %87, %88 : vector<8x128xf32>
    %90 = arith.mulf %48, %48 : vector<8x128xf32>
    %91 = arith.addf %89, %90 : vector<8x128xf32>
    %92 = arith.mulf %55, %55 : vector<8x128xf32>
    %93 = arith.addf %91, %92 : vector<8x128xf32>
    %cst_24 = arith.constant dense<0.000000e+00> : vector<8xf32>
    %94 = vector.multi_reduction <add>, %93, %cst_24 [1] : vector<8x128xf32> to vector<8xf32>
    %95 = vector.shape_cast %94 : vector<8xf32> to vector<8x1xf32>
    %cst_25 = arith.constant dense<0.000000e+00> : vector<8xf32>
    %96 = vector.multi_reduction <add>, %20, %cst_25 [1] : vector<8x128xf32> to vector<8xf32>
    %97 = vector.shape_cast %96 : vector<8xf32> to vector<8x1xf32>
    %cst_26 = arith.constant dense<0.000000e+00> : vector<8xf32>
    %98 = vector.multi_reduction <add>, %27, %cst_26 [1] : vector<8x128xf32> to vector<8xf32>
    %99 = vector.shape_cast %98 : vector<8xf32> to vector<8x1xf32>
    %cst_27 = arith.constant dense<0.000000e+00> : vector<8xf32>
    %100 = vector.multi_reduction <add>, %34, %cst_27 [1] : vector<8x128xf32> to vector<8xf32>
    %101 = vector.shape_cast %100 : vector<8xf32> to vector<8x1xf32>
    %cst_28 = arith.constant dense<0.000000e+00> : vector<8xf32>
    %102 = vector.multi_reduction <add>, %41, %cst_28 [1] : vector<8x128xf32> to vector<8xf32>
    %103 = vector.shape_cast %102 : vector<8xf32> to vector<8x1xf32>
    %cst_29 = arith.constant dense<0.000000e+00> : vector<8xf32>
    %104 = vector.multi_reduction <add>, %48, %cst_29 [1] : vector<8x128xf32> to vector<8xf32>
    %105 = vector.shape_cast %104 : vector<8xf32> to vector<8x1xf32>
    %cst_30 = arith.constant dense<0.000000e+00> : vector<8xf32>
    %106 = vector.multi_reduction <add>, %55, %cst_30 [1] : vector<8x128xf32> to vector<8xf32>
    %107 = vector.shape_cast %106 : vector<8xf32> to vector<8x1xf32>
    %c0_31 = arith.constant 0 : index
    %c0_32 = arith.constant 0 : index
    %108 = vector.load %arg6[%c0_31, %c0_32] : memref<8x24xf32, #tpu.memory_space<vmem>>, vector<8x16xf32>
    %109 = tpu.concatenate %58, %61, %64, %67, %70, %73, %76, %79, %82, %95, %97, %99, %101, %103, %105, %107 in 1 : vector<8x1xf32>, vector<8x1xf32>, vector<8x1xf32>, vector<8x1xf32>, vector<8x1xf32>, vector<8x1xf32>, vector<8x1xf32>, vector<8x1xf32>, vector<8x1xf32>, vector<8x1xf32>, vector<8x1xf32>, vector<8x1xf32>, vector<8x1xf32>, vector<8x1xf32>, vector<8x1xf32>, vector<8x1xf32> -> vector<8x16xf32>
    %110 = arith.addf %108, %109 : vector<8x16xf32>
    %c0_33 = arith.constant 0 : index
    %c0_34 = arith.constant 0 : index
    %111 = vector.load %arg6[%c0_33, %c0_34] : memref<8x24xf32, #tpu.memory_space<vmem>>, vector<8x16xf32>
    tpu.vector_store %arg6[%c0_33, %c0_34], %110 {strides = array<i32>} : memref<8x24xf32, #tpu.memory_space<vmem>>, vector<8x16xf32>,
    %c0_i32_35 = arith.constant 0 : i32
    %112 = arith.cmpi eq, %arg1, %c0_i32_35 : i32
    %113 = arith.extui %112 : i1 to i32
    %c0_i32_36 = arith.constant 0 : i32
    %114 = arith.cmpi ne, %113, %c0_i32_36 : i32
    scf.if %114 {
      %c0_37 = arith.constant 0 : index
      %c0_38 = arith.constant 0 : index
      %115 = vector.load %arg6[%c0_37, %c0_38] : memref<8x24xf32, #tpu.memory_space<vmem>>, vector<8x16xf32>
      %116 = arith.sitofp %2 : vector<8x1xi32> to vector<8x1xf32>
      %cst_39 = arith.constant 1.000000e+00 : f32
      %117 = vector.broadcast %cst_39 : f32 to vector<8x1xf32>
      %118 = arith.maximumf %116, %117 : vector<8x1xf32>
      %119 = tpu.reciprocal %118 {approx = true} : vector<8x1xf32> -> vector<8x1xf32>
      %120 = arith.mulf %118, %119 : vector<8x1xf32>
      %cst_40 = arith.constant 2.000000e+00 : f32
      %121 = vector.broadcast %cst_40 : f32 to vector<8x1xf32>
      %122 = arith.subf %121, %120 : vector<8x1xf32>
      %123 = arith.mulf %119, %122 : vector<8x1xf32>
      %c0_i32_41 = arith.constant 0 : i32
      %124 = vector.broadcast %c0_i32_41 : i32 to vector<8x1xi32>
      %125 = arith.cmpi sgt, %2, %124 : vector<8x1xi32>
      %cst_42 = arith.constant 0.000000e+00 : f32
      %126 = vector.broadcast %cst_42 : f32 to vector<8x1xf32>
      %127 = arith.select %125, %123, %126 : vector<8x1xi1>, vector<8x1xf32>
      %128 = vector.extract_strided_slice %115 {offsets = [0, 0], sizes = [8, 1], strides = [1, 1]} : vector<8x16xf32> to vector<8x1xf32>
      %129 = vector.extract_strided_slice %115 {offsets = [0, 1], sizes = [8, 1], strides = [1, 1]} : vector<8x16xf32> to vector<8x1xf32>
      %130 = vector.extract_strided_slice %115 {offsets = [0, 2], sizes = [8, 1], strides = [1, 1]} : vector<8x16xf32> to vector<8x1xf32>
      %131 = vector.extract_strided_slice %115 {offsets = [0, 3], sizes = [8, 1], strides = [1, 1]} : vector<8x16xf32> to vector<8x1xf32>
      %132 = vector.extract_strided_slice %115 {offsets = [0, 4], sizes = [8, 1], strides = [1, 1]} : vector<8x16xf32> to vector<8x1xf32>
      %133 = vector.extract_strided_slice %115 {offsets = [0, 5], sizes = [8, 1], strides = [1, 1]} : vector<8x16xf32> to vector<8x1xf32>
      %134 = vector.extract_strided_slice %115 {offsets = [0, 6], sizes = [8, 1], strides = [1, 1]} : vector<8x16xf32> to vector<8x1xf32>
      %135 = vector.extract_strided_slice %115 {offsets = [0, 7], sizes = [8, 1], strides = [1, 1]} : vector<8x16xf32> to vector<8x1xf32>
      %136 = vector.extract_strided_slice %115 {offsets = [0, 8], sizes = [8, 1], strides = [1, 1]} : vector<8x16xf32> to vector<8x1xf32>
      %137 = vector.extract_strided_slice %115 {offsets = [0, 9], sizes = [8, 1], strides = [1, 1]} : vector<8x16xf32> to vector<8x1xf32>
      %138 = vector.extract_strided_slice %115 {offsets = [0, 10], sizes = [8, 1], strides = [1, 1]} : vector<8x16xf32> to vector<8x1xf32>
      %139 = vector.extract_strided_slice %115 {offsets = [0, 11], sizes = [8, 1], strides = [1, 1]} : vector<8x16xf32> to vector<8x1xf32>
      %140 = vector.extract_strided_slice %115 {offsets = [0, 12], sizes = [8, 1], strides = [1, 1]} : vector<8x16xf32> to vector<8x1xf32>
      %141 = vector.extract_strided_slice %115 {offsets = [0, 13], sizes = [8, 1], strides = [1, 1]} : vector<8x16xf32> to vector<8x1xf32>
      %142 = vector.extract_strided_slice %115 {offsets = [0, 14], sizes = [8, 1], strides = [1, 1]} : vector<8x16xf32> to vector<8x1xf32>
      %143 = vector.extract_strided_slice %115 {offsets = [0, 15], sizes = [8, 1], strides = [1, 1]} : vector<8x16xf32> to vector<8x1xf32>
      %144 = arith.mulf %138, %141 : vector<8x1xf32>
      %145 = arith.mulf %144, %127 : vector<8x1xf32>
      %146 = arith.subf %128, %145 : vector<8x1xf32>
      %147 = arith.mulf %138, %142 : vector<8x1xf32>
      %148 = arith.mulf %147, %127 : vector<8x1xf32>
      %149 = arith.subf %129, %148 : vector<8x1xf32>
      %150 = arith.mulf %138, %143 : vector<8x1xf32>
      %151 = arith.mulf %150, %127 : vector<8x1xf32>
      %152 = arith.subf %130, %151 : vector<8x1xf32>
      %153 = arith.mulf %139, %141 : vector<8x1xf32>
      %154 = arith.mulf %153, %127 : vector<8x1xf32>
      %155 = arith.subf %131, %154 : vector<8x1xf32>
      %156 = arith.mulf %139, %142 : vector<8x1xf32>
      %157 = arith.mulf %156, %127 : vector<8x1xf32>
      %158 = arith.subf %132, %157 : vector<8x1xf32>
      %159 = arith.mulf %139, %143 : vector<8x1xf32>
      %160 = arith.mulf %159, %127 : vector<8x1xf32>
      %161 = arith.subf %133, %160 : vector<8x1xf32>
      %162 = arith.mulf %140, %141 : vector<8x1xf32>
      %163 = arith.mulf %162, %127 : vector<8x1xf32>
      %164 = arith.subf %134, %163 : vector<8x1xf32>
      %165 = arith.mulf %140, %142 : vector<8x1xf32>
      %166 = arith.mulf %165, %127 : vector<8x1xf32>
      %167 = arith.subf %135, %166 : vector<8x1xf32>
      %168 = arith.mulf %140, %143 : vector<8x1xf32>
      %169 = arith.mulf %168, %127 : vector<8x1xf32>
      %170 = arith.subf %136, %169 : vector<8x1xf32>
      %171 = arith.mulf %138, %138 : vector<8x1xf32>
      %172 = arith.mulf %139, %139 : vector<8x1xf32>
      %173 = arith.addf %171, %172 : vector<8x1xf32>
      %174 = arith.mulf %140, %140 : vector<8x1xf32>
      %175 = arith.addf %173, %174 : vector<8x1xf32>
      %176 = arith.mulf %141, %141 : vector<8x1xf32>
      %177 = arith.addf %175, %176 : vector<8x1xf32>
      %178 = arith.mulf %142, %142 : vector<8x1xf32>
      %179 = arith.addf %177, %178 : vector<8x1xf32>
      %180 = arith.mulf %143, %143 : vector<8x1xf32>
      %181 = arith.addf %179, %180 : vector<8x1xf32>
      %182 = arith.mulf %181, %127 : vector<8x1xf32>
      %183 = arith.subf %137, %182 : vector<8x1xf32>
      %cst_43 = arith.constant 1.000000e-30 : f32
      %184 = vector.broadcast %cst_43 : f32 to vector<8x1xf32>
      %185 = arith.maximumf %183, %184 : vector<8x1xf32>
      %186 = tpu.reciprocal %185 {approx = true} : vector<8x1xf32> -> vector<8x1xf32>
      %187 = arith.mulf %185, %186 : vector<8x1xf32>
      %cst_44 = arith.constant 2.000000e+00 : f32
      %188 = vector.broadcast %cst_44 : f32 to vector<8x1xf32>
      %189 = arith.subf %188, %187 : vector<8x1xf32>
      %190 = arith.mulf %186, %189 : vector<8x1xf32>
      %cst_45 = arith.constant 2.000000e+00 : f32
      %191 = vector.broadcast %cst_45 : f32 to vector<8x1xf32>
      %192 = arith.mulf %191, %190 : vector<8x1xf32>
      %193 = arith.mulf %146, %192 : vector<8x1xf32>
      %194 = arith.mulf %149, %192 : vector<8x1xf32>
      %195 = arith.mulf %152, %192 : vector<8x1xf32>
      %196 = arith.mulf %155, %192 : vector<8x1xf32>
      %197 = arith.mulf %158, %192 : vector<8x1xf32>
      %198 = arith.mulf %161, %192 : vector<8x1xf32>
      %199 = arith.mulf %164, %192 : vector<8x1xf32>
      %200 = arith.mulf %167, %192 : vector<8x1xf32>
      %201 = arith.mulf %170, %192 : vector<8x1xf32>
      %202 = arith.mulf %193, %193 : vector<8x1xf32>
      %203 = arith.mulf %194, %194 : vector<8x1xf32>
      %204 = arith.addf %202, %203 : vector<8x1xf32>
      %205 = arith.mulf %195, %195 : vector<8x1xf32>
      %206 = arith.addf %204, %205 : vector<8x1xf32>
      %207 = arith.mulf %196, %196 : vector<8x1xf32>
      %208 = arith.addf %206, %207 : vector<8x1xf32>
      %209 = arith.mulf %197, %197 : vector<8x1xf32>
      %210 = arith.addf %208, %209 : vector<8x1xf32>
      %211 = arith.mulf %198, %198 : vector<8x1xf32>
      %212 = arith.addf %210, %211 : vector<8x1xf32>
      %213 = arith.mulf %199, %199 : vector<8x1xf32>
      %214 = arith.addf %212, %213 : vector<8x1xf32>
      %215 = arith.mulf %200, %200 : vector<8x1xf32>
      %216 = arith.addf %214, %215 : vector<8x1xf32>
      %217 = arith.mulf %201, %201 : vector<8x1xf32>
      %218 = arith.addf %216, %217 : vector<8x1xf32>
      %cst_46 = arith.constant -2.000000e+00 : f32
      %219 = vector.broadcast %cst_46 : f32 to vector<8x1xf32>
      %220 = arith.mulf %219, %218 : vector<8x1xf32>
      %221 = arith.mulf %197, %201 : vector<8x1xf32>
      %222 = arith.mulf %198, %200 : vector<8x1xf32>
      %223 = arith.subf %221, %222 : vector<8x1xf32>
      %224 = arith.mulf %193, %223 : vector<8x1xf32>
      %225 = arith.mulf %196, %201 : vector<8x1xf32>
      %226 = arith.mulf %198, %199 : vector<8x1xf32>
      %227 = arith.subf %225, %226 : vector<8x1xf32>
      %228 = arith.mulf %194, %227 : vector<8x1xf32>
      %229 = arith.subf %224, %228 : vector<8x1xf32>
      %230 = arith.mulf %196, %200 : vector<8x1xf32>
      %231 = arith.mulf %197, %199 : vector<8x1xf32>
      %232 = arith.subf %230, %231 : vector<8x1xf32>
      %233 = arith.mulf %195, %232 : vector<8x1xf32>
      %234 = arith.addf %229, %233 : vector<8x1xf32>
      %cst_47 = arith.constant -8.000000e+00 : f32
      %235 = vector.broadcast %cst_47 : f32 to vector<8x1xf32>
      %236 = arith.mulf %235, %234 : vector<8x1xf32>
      %237 = arith.addf %193, %197 : vector<8x1xf32>
      %238 = arith.addf %237, %201 : vector<8x1xf32>
      %239 = arith.subf %198, %200 : vector<8x1xf32>
      %240 = arith.subf %199, %195 : vector<8x1xf32>
      %241 = arith.subf %194, %196 : vector<8x1xf32>
      %242 = arith.subf %193, %197 : vector<8x1xf32>
      %243 = arith.subf %242, %201 : vector<8x1xf32>
      %244 = arith.addf %194, %196 : vector<8x1xf32>
      %245 = arith.addf %199, %195 : vector<8x1xf32>
      %cst_48 = arith.constant 0.000000e+00 : f32
      %246 = vector.broadcast %cst_48 : f32 to vector<8x1xf32>
      %247 = arith.subf %246, %193 : vector<8x1xf32>
      %248 = arith.addf %247, %197 : vector<8x1xf32>
      %249 = arith.subf %248, %201 : vector<8x1xf32>
      %250 = arith.addf %198, %200 : vector<8x1xf32>
      %cst_49 = arith.constant 0.000000e+00 : f32
      %251 = vector.broadcast %cst_49 : f32 to vector<8x1xf32>
      %252 = arith.subf %251, %193 : vector<8x1xf32>
      %253 = arith.subf %252, %197 : vector<8x1xf32>
      %254 = arith.addf %253, %201 : vector<8x1xf32>
      %255 = arith.mulf %249, %254 : vector<8x1xf32>
      %256 = arith.mulf %250, %250 : vector<8x1xf32>
      %257 = arith.subf %255, %256 : vector<8x1xf32>
      %258 = arith.mulf %243, %257 : vector<8x1xf32>
      %259 = arith.mulf %244, %254 : vector<8x1xf32>
      %260 = arith.mulf %250, %245 : vector<8x1xf32>
      %261 = arith.subf %259, %260 : vector<8x1xf32>
      %262 = arith.mulf %244, %261 : vector<8x1xf32>
      %263 = arith.subf %258, %262 : vector<8x1xf32>
      %264 = arith.mulf %244, %250 : vector<8x1xf32>
      %265 = arith.mulf %249, %245 : vector<8x1xf32>
      %266 = arith.subf %264, %265 : vector<8x1xf32>
      %267 = arith.mulf %245, %266 : vector<8x1xf32>
      %268 = arith.addf %263, %267 : vector<8x1xf32>
      %269 = arith.mulf %238, %268 : vector<8x1xf32>
      %270 = arith.mulf %249, %254 : vector<8x1xf32>
      %271 = arith.mulf %250, %250 : vector<8x1xf32>
      %272 = arith.subf %270, %271 : vector<8x1xf32>
      %273 = arith.mulf %239, %272 : vector<8x1xf32>
      %274 = arith.mulf %240, %254 : vector<8x1xf32>
      %275 = arith.mulf %250, %241 : vector<8x1xf32>
      %276 = arith.subf %274, %275 : vector<8x1xf32>
      %277 = arith.mulf %244, %276 : vector<8x1xf32>
      %278 = arith.subf %273, %277 : vector<8x1xf32>
      %279 = arith.mulf %240, %250 : vector<8x1xf32>
      %280 = arith.mulf %249, %241 : vector<8x1xf32>
      %281 = arith.subf %279, %280 : vector<8x1xf32>
      %282 = arith.mulf %245, %281 : vector<8x1xf32>
      %283 = arith.addf %278, %282 : vector<8x1xf32>
      %284 = arith.mulf %239, %283 : vector<8x1xf32>
      %285 = arith.subf %269, %284 : vector<8x1xf32>
      %286 = arith.mulf %244, %254 : vector<8x1xf32>
      %287 = arith.mulf %250, %245 : vector<8x1xf32>
      %288 = arith.subf %286, %287 : vector<8x1xf32>
      %289 = arith.mulf %239, %288 : vector<8x1xf32>
      %290 = arith.mulf %240, %254 : vector<8x1xf32>
      %291 = arith.mulf %250, %241 : vector<8x1xf32>
      %292 = arith.subf %290, %291 : vector<8x1xf32>
      %293 = arith.mulf %243, %292 : vector<8x1xf32>
      %294 = arith.subf %289, %293 : vector<8x1xf32>
      %295 = arith.mulf %240, %245 : vector<8x1xf32>
      %296 = arith.mulf %244, %241 : vector<8x1xf32>
      %297 = arith.subf %295, %296 : vector<8x1xf32>
      %298 = arith.mulf %245, %297 : vector<8x1xf32>
      %299 = arith.addf %294, %298 : vector<8x1xf32>
      %300 = arith.mulf %240, %299 : vector<8x1xf32>
      %301 = arith.addf %285, %300 : vector<8x1xf32>
      %302 = arith.mulf %244, %250 : vector<8x1xf32>
      %303 = arith.mulf %249, %245 : vector<8x1xf32>
      %304 = arith.subf %302, %303 : vector<8x1xf32>
      %305 = arith.mulf %239, %304 : vector<8x1xf32>
      %306 = arith.mulf %240, %250 : vector<8x1xf32>
      %307 = arith.mulf %249, %241 : vector<8x1xf32>
      %308 = arith.subf %306, %307 : vector<8x1xf32>
      %309 = arith.mulf %243, %308 : vector<8x1xf32>
      %310 = arith.subf %305, %309 : vector<8x1xf32>
      %311 = arith.mulf %240, %245 : vector<8x1xf32>
      %312 = arith.mulf %244, %241 : vector<8x1xf32>
      %313 = arith.subf %311, %312 : vector<8x1xf32>
      %314 = arith.mulf %244, %313 : vector<8x1xf32>
      %315 = arith.addf %310, %314 : vector<8x1xf32>
      %316 = arith.mulf %241, %315 : vector<8x1xf32>
      %317 = arith.subf %301, %316 : vector<8x1xf32>
      %cst_50 = arith.constant 1.000000e+00 : f32
      %318 = vector.broadcast %cst_50 : f32 to vector<8x1xf32>
      %c0_i32_51 = arith.constant 0 : i32
      %319 = arith.mulf %318, %318 : vector<8x1xf32>
      %320 = arith.addf %319, %220 : vector<8x1xf32>
      %321 = arith.mulf %320, %318 : vector<8x1xf32>
      %322 = arith.addf %321, %236 : vector<8x1xf32>
      %323 = arith.mulf %322, %318 : vector<8x1xf32>
      %324 = arith.addf %323, %317 : vector<8x1xf32>
      %cst_52 = arith.constant 2.000000e+00 : f32
      %325 = vector.broadcast %cst_52 : f32 to vector<8x1xf32>
      %326 = arith.mulf %325, %319 : vector<8x1xf32>
      %327 = arith.mulf %326, %318 : vector<8x1xf32>
      %328 = arith.addf %327, %321 : vector<8x1xf32>
      %329 = arith.addf %328, %322 : vector<8x1xf32>
      %330 = math.absf %329 : vector<8x1xf32>
      %cst_53 = arith.constant 9.99999993E-9 : f32
      %331 = vector.broadcast %cst_53 : f32 to vector<8x1xf32>
      %332 = arith.cmpf ogt, %330, %331 : vector<8x1xf32>
      %cst_54 = arith.constant 0.000000e+00 : f32
      %333 = vector.broadcast %cst_54 : f32 to vector<8x1xf32>
      %334 = arith.cmpf oge, %329, %333 : vector<8x1xf32>
      %cst_55 = arith.constant 9.99999993E-9 : f32
      %cst_56 = arith.constant -9.99999993E-9 : f32
      %335 = vector.broadcast %cst_55 : f32 to vector<8x1xf32>
      %336 = vector.broadcast %cst_56 : f32 to vector<8x1xf32>
      %337 = arith.select %334, %335, %336 : vector<8x1xi1>, vector<8x1xf32>
      %338 = arith.select %332, %329, %337 : vector<8x1xi1>, vector<8x1xf32>
      %339 = arith.divf %324, %338 : vector<8x1xf32>
      %340 = arith.subf %318, %339 : vector<8x1xf32>
      %c1_i32 = arith.constant 1 : i32
      %341 = arith.mulf %340, %340 : vector<8x1xf32>
      %342 = arith.addf %341, %220 : vector<8x1xf32>
      %343 = arith.mulf %342, %340 : vector<8x1xf32>
      %344 = arith.addf %343, %236 : vector<8x1xf32>
      %345 = arith.mulf %344, %340 : vector<8x1xf32>
      %346 = arith.addf %345, %317 : vector<8x1xf32>
      %cst_57 = arith.constant 2.000000e+00 : f32
      %347 = vector.broadcast %cst_57 : f32 to vector<8x1xf32>
      %348 = arith.mulf %347, %341 : vector<8x1xf32>
      %349 = arith.mulf %348, %340 : vector<8x1xf32>
      %350 = arith.addf %349, %343 : vector<8x1xf32>
      %351 = arith.addf %350, %344 : vector<8x1xf32>
      %352 = math.absf %351 : vector<8x1xf32>
      %cst_58 = arith.constant 9.99999993E-9 : f32
      %353 = vector.broadcast %cst_58 : f32 to vector<8x1xf32>
      %354 = arith.cmpf ogt, %352, %353 : vector<8x1xf32>
      %cst_59 = arith.constant 0.000000e+00 : f32
      %355 = vector.broadcast %cst_59 : f32 to vector<8x1xf32>
      %356 = arith.cmpf oge, %351, %355 : vector<8x1xf32>
      %cst_60 = arith.constant 9.99999993E-9 : f32
      %cst_61 = arith.constant -9.99999993E-9 : f32
      %357 = vector.broadcast %cst_60 : f32 to vector<8x1xf32>
      %358 = vector.broadcast %cst_61 : f32 to vector<8x1xf32>
      %359 = arith.select %356, %357, %358 : vector<8x1xi1>, vector<8x1xf32>
      %360 = arith.select %354, %351, %359 : vector<8x1xi1>, vector<8x1xf32>
      %361 = arith.divf %346, %360 : vector<8x1xf32>
      %362 = arith.subf %340, %361 : vector<8x1xf32>
      %c2_i32 = arith.constant 2 : i32
      %363 = arith.mulf %362, %362 : vector<8x1xf32>
      %364 = arith.addf %363, %220 : vector<8x1xf32>
      %365 = arith.mulf %364, %362 : vector<8x1xf32>
      %366 = arith.addf %365, %236 : vector<8x1xf32>
      %367 = arith.mulf %366, %362 : vector<8x1xf32>
      %368 = arith.addf %367, %317 : vector<8x1xf32>
      %cst_62 = arith.constant 2.000000e+00 : f32
      %369 = vector.broadcast %cst_62 : f32 to vector<8x1xf32>
      %370 = arith.mulf %369, %363 : vector<8x1xf32>
      %371 = arith.mulf %370, %362 : vector<8x1xf32>
      %372 = arith.addf %371, %365 : vector<8x1xf32>
      %373 = arith.addf %372, %366 : vector<8x1xf32>
      %374 = math.absf %373 : vector<8x1xf32>
      %cst_63 = arith.constant 9.99999993E-9 : f32
      %375 = vector.broadcast %cst_63 : f32 to vector<8x1xf32>
      %376 = arith.cmpf ogt, %374, %375 : vector<8x1xf32>
      %cst_64 = arith.constant 0.000000e+00 : f32
      %377 = vector.broadcast %cst_64 : f32 to vector<8x1xf32>
      %378 = arith.cmpf oge, %373, %377 : vector<8x1xf32>
      %cst_65 = arith.constant 9.99999993E-9 : f32
      %cst_66 = arith.constant -9.99999993E-9 : f32
      %379 = vector.broadcast %cst_65 : f32 to vector<8x1xf32>
      %380 = vector.broadcast %cst_66 : f32 to vector<8x1xf32>
      %381 = arith.select %378, %379, %380 : vector<8x1xi1>, vector<8x1xf32>
      %382 = arith.select %376, %373, %381 : vector<8x1xi1>, vector<8x1xf32>
      %383 = arith.divf %368, %382 : vector<8x1xf32>
      %384 = arith.subf %362, %383 : vector<8x1xf32>
      %c3_i32 = arith.constant 3 : i32
      %385 = arith.mulf %384, %384 : vector<8x1xf32>
      %386 = arith.addf %385, %220 : vector<8x1xf32>
      %387 = arith.mulf %386, %384 : vector<8x1xf32>
      %388 = arith.addf %387, %236 : vector<8x1xf32>
      %389 = arith.mulf %388, %384 : vector<8x1xf32>
      %390 = arith.addf %389, %317 : vector<8x1xf32>
      %cst_67 = arith.constant 2.000000e+00 : f32
      %391 = vector.broadcast %cst_67 : f32 to vector<8x1xf32>
      %392 = arith.mulf %391, %385 : vector<8x1xf32>
      %393 = arith.mulf %392, %384 : vector<8x1xf32>
      %394 = arith.addf %393, %387 : vector<8x1xf32>
      %395 = arith.addf %394, %388 : vector<8x1xf32>
      %396 = math.absf %395 : vector<8x1xf32>
      %cst_68 = arith.constant 9.99999993E-9 : f32
      %397 = vector.broadcast %cst_68 : f32 to vector<8x1xf32>
      %398 = arith.cmpf ogt, %396, %397 : vector<8x1xf32>
      %cst_69 = arith.constant 0.000000e+00 : f32
      %399 = vector.broadcast %cst_69 : f32 to vector<8x1xf32>
      %400 = arith.cmpf oge, %395, %399 : vector<8x1xf32>
      %cst_70 = arith.constant 9.99999993E-9 : f32
      %cst_71 = arith.constant -9.99999993E-9 : f32
      %401 = vector.broadcast %cst_70 : f32 to vector<8x1xf32>
      %402 = vector.broadcast %cst_71 : f32 to vector<8x1xf32>
      %403 = arith.select %400, %401, %402 : vector<8x1xi1>, vector<8x1xf32>
      %404 = arith.select %398, %395, %403 : vector<8x1xi1>, vector<8x1xf32>
      %405 = arith.divf %390, %404 : vector<8x1xf32>
      %406 = arith.subf %384, %405 : vector<8x1xf32>
      %c4_i32 = arith.constant 4 : i32
      %407 = arith.mulf %406, %406 : vector<8x1xf32>
      %408 = arith.addf %407, %220 : vector<8x1xf32>
      %409 = arith.mulf %408, %406 : vector<8x1xf32>
      %410 = arith.addf %409, %236 : vector<8x1xf32>
      %411 = arith.mulf %410, %406 : vector<8x1xf32>
      %412 = arith.addf %411, %317 : vector<8x1xf32>
      %cst_72 = arith.constant 2.000000e+00 : f32
      %413 = vector.broadcast %cst_72 : f32 to vector<8x1xf32>
      %414 = arith.mulf %413, %407 : vector<8x1xf32>
      %415 = arith.mulf %414, %406 : vector<8x1xf32>
      %416 = arith.addf %415, %409 : vector<8x1xf32>
      %417 = arith.addf %416, %410 : vector<8x1xf32>
      %418 = math.absf %417 : vector<8x1xf32>
      %cst_73 = arith.constant 9.99999993E-9 : f32
      %419 = vector.broadcast %cst_73 : f32 to vector<8x1xf32>
      %420 = arith.cmpf ogt, %418, %419 : vector<8x1xf32>
      %cst_74 = arith.constant 0.000000e+00 : f32
      %421 = vector.broadcast %cst_74 : f32 to vector<8x1xf32>
      %422 = arith.cmpf oge, %417, %421 : vector<8x1xf32>
      %cst_75 = arith.constant 9.99999993E-9 : f32
      %cst_76 = arith.constant -9.99999993E-9 : f32
      %423 = vector.broadcast %cst_75 : f32 to vector<8x1xf32>
      %424 = vector.broadcast %cst_76 : f32 to vector<8x1xf32>
      %425 = arith.select %422, %423, %424 : vector<8x1xi1>, vector<8x1xf32>
      %426 = arith.select %420, %417, %425 : vector<8x1xi1>, vector<8x1xf32>
      %427 = arith.divf %412, %426 : vector<8x1xf32>
      %428 = arith.subf %406, %427 : vector<8x1xf32>
      %c5_i32 = arith.constant 5 : i32
      %429 = arith.mulf %428, %428 : vector<8x1xf32>
      %430 = arith.addf %429, %220 : vector<8x1xf32>
      %431 = arith.mulf %430, %428 : vector<8x1xf32>
      %432 = arith.addf %431, %236 : vector<8x1xf32>
      %433 = arith.mulf %432, %428 : vector<8x1xf32>
      %434 = arith.addf %433, %317 : vector<8x1xf32>
      %cst_77 = arith.constant 2.000000e+00 : f32
      %435 = vector.broadcast %cst_77 : f32 to vector<8x1xf32>
      %436 = arith.mulf %435, %429 : vector<8x1xf32>
      %437 = arith.mulf %436, %428 : vector<8x1xf32>
      %438 = arith.addf %437, %431 : vector<8x1xf32>
      %439 = arith.addf %438, %432 : vector<8x1xf32>
      %440 = math.absf %439 : vector<8x1xf32>
      %cst_78 = arith.constant 9.99999993E-9 : f32
      %441 = vector.broadcast %cst_78 : f32 to vector<8x1xf32>
      %442 = arith.cmpf ogt, %440, %441 : vector<8x1xf32>
      %cst_79 = arith.constant 0.000000e+00 : f32
      %443 = vector.broadcast %cst_79 : f32 to vector<8x1xf32>
      %444 = arith.cmpf oge, %439, %443 : vector<8x1xf32>
      %cst_80 = arith.constant 9.99999993E-9 : f32
      %cst_81 = arith.constant -9.99999993E-9 : f32
      %445 = vector.broadcast %cst_80 : f32 to vector<8x1xf32>
      %446 = vector.broadcast %cst_81 : f32 to vector<8x1xf32>
      %447 = arith.select %444, %445, %446 : vector<8x1xi1>, vector<8x1xf32>
      %448 = arith.select %442, %439, %447 : vector<8x1xi1>, vector<8x1xf32>
      %449 = arith.divf %434, %448 : vector<8x1xf32>
      %450 = arith.subf %428, %449 : vector<8x1xf32>
      %c6_i32 = arith.constant 6 : i32
      %451 = arith.mulf %450, %450 : vector<8x1xf32>
      %452 = arith.addf %451, %220 : vector<8x1xf32>
      %453 = arith.mulf %452, %450 : vector<8x1xf32>
      %454 = arith.addf %453, %236 : vector<8x1xf32>
      %455 = arith.mulf %454, %450 : vector<8x1xf32>
      %456 = arith.addf %455, %317 : vector<8x1xf32>
      %cst_82 = arith.constant 2.000000e+00 : f32
      %457 = vector.broadcast %cst_82 : f32 to vector<8x1xf32>
      %458 = arith.mulf %457, %451 : vector<8x1xf32>
      %459 = arith.mulf %458, %450 : vector<8x1xf32>
      %460 = arith.addf %459, %453 : vector<8x1xf32>
      %461 = arith.addf %460, %454 : vector<8x1xf32>
      %462 = math.absf %461 : vector<8x1xf32>
      %cst_83 = arith.constant 9.99999993E-9 : f32
      %463 = vector.broadcast %cst_83 : f32 to vector<8x1xf32>
      %464 = arith.cmpf ogt, %462, %463 : vector<8x1xf32>
      %cst_84 = arith.constant 0.000000e+00 : f32
      %465 = vector.broadcast %cst_84 : f32 to vector<8x1xf32>
      %466 = arith.cmpf oge, %461, %465 : vector<8x1xf32>
      %cst_85 = arith.constant 9.99999993E-9 : f32
      %cst_86 = arith.constant -9.99999993E-9 : f32
      %467 = vector.broadcast %cst_85 : f32 to vector<8x1xf32>
      %468 = vector.broadcast %cst_86 : f32 to vector<8x1xf32>
      %469 = arith.select %466, %467, %468 : vector<8x1xi1>, vector<8x1xf32>
      %470 = arith.select %464, %461, %469 : vector<8x1xi1>, vector<8x1xf32>
      %471 = arith.divf %456, %470 : vector<8x1xf32>
      %472 = arith.subf %450, %471 : vector<8x1xf32>
      %c7_i32 = arith.constant 7 : i32
      %473 = arith.mulf %472, %472 : vector<8x1xf32>
      %474 = arith.addf %473, %220 : vector<8x1xf32>
      %475 = arith.mulf %474, %472 : vector<8x1xf32>
      %476 = arith.addf %475, %236 : vector<8x1xf32>
      %477 = arith.mulf %476, %472 : vector<8x1xf32>
      %478 = arith.addf %477, %317 : vector<8x1xf32>
      %cst_87 = arith.constant 2.000000e+00 : f32
      %479 = vector.broadcast %cst_87 : f32 to vector<8x1xf32>
      %480 = arith.mulf %479, %473 : vector<8x1xf32>
      %481 = arith.mulf %480, %472 : vector<8x1xf32>
      %482 = arith.addf %481, %475 : vector<8x1xf32>
      %483 = arith.addf %482, %476 : vector<8x1xf32>
      %484 = math.absf %483 : vector<8x1xf32>
      %cst_88 = arith.constant 9.99999993E-9 : f32
      %485 = vector.broadcast %cst_88 : f32 to vector<8x1xf32>
      %486 = arith.cmpf ogt, %484, %485 : vector<8x1xf32>
      %cst_89 = arith.constant 0.000000e+00 : f32
      %487 = vector.broadcast %cst_89 : f32 to vector<8x1xf32>
      %488 = arith.cmpf oge, %483, %487 : vector<8x1xf32>
      %cst_90 = arith.constant 9.99999993E-9 : f32
      %cst_91 = arith.constant -9.99999993E-9 : f32
      %489 = vector.broadcast %cst_90 : f32 to vector<8x1xf32>
      %490 = vector.broadcast %cst_91 : f32 to vector<8x1xf32>
      %491 = arith.select %488, %489, %490 : vector<8x1xi1>, vector<8x1xf32>
      %492 = arith.select %486, %483, %491 : vector<8x1xi1>, vector<8x1xf32>
      %493 = arith.divf %478, %492 : vector<8x1xf32>
      %494 = arith.subf %472, %493 : vector<8x1xf32>
      %c8_i32 = arith.constant 8 : i32
      %495 = arith.mulf %494, %494 : vector<8x1xf32>
      %496 = arith.addf %495, %220 : vector<8x1xf32>
      %497 = arith.mulf %496, %494 : vector<8x1xf32>
      %498 = arith.addf %497, %236 : vector<8x1xf32>
      %499 = arith.mulf %498, %494 : vector<8x1xf32>
      %500 = arith.addf %499, %317 : vector<8x1xf32>
      %cst_92 = arith.constant 2.000000e+00 : f32
      %501 = vector.broadcast %cst_92 : f32 to vector<8x1xf32>
      %502 = arith.mulf %501, %495 : vector<8x1xf32>
      %503 = arith.mulf %502, %494 : vector<8x1xf32>
      %504 = arith.addf %503, %497 : vector<8x1xf32>
      %505 = arith.addf %504, %498 : vector<8x1xf32>
      %506 = math.absf %505 : vector<8x1xf32>
      %cst_93 = arith.constant 9.99999993E-9 : f32
      %507 = vector.broadcast %cst_93 : f32 to vector<8x1xf32>
      %508 = arith.cmpf ogt, %506, %507 : vector<8x1xf32>
      %cst_94 = arith.constant 0.000000e+00 : f32
      %509 = vector.broadcast %cst_94 : f32 to vector<8x1xf32>
      %510 = arith.cmpf oge, %505, %509 : vector<8x1xf32>
      %cst_95 = arith.constant 9.99999993E-9 : f32
      %cst_96 = arith.constant -9.99999993E-9 : f32
      %511 = vector.broadcast %cst_95 : f32 to vector<8x1xf32>
      %512 = vector.broadcast %cst_96 : f32 to vector<8x1xf32>
      %513 = arith.select %510, %511, %512 : vector<8x1xi1>, vector<8x1xf32>
      %514 = arith.select %508, %505, %513 : vector<8x1xi1>, vector<8x1xf32>
      %515 = arith.divf %500, %514 : vector<8x1xf32>
      %516 = arith.subf %494, %515 : vector<8x1xf32>
      %c9_i32 = arith.constant 9 : i32
      %517 = arith.mulf %516, %516 : vector<8x1xf32>
      %518 = arith.addf %517, %220 : vector<8x1xf32>
      %519 = arith.mulf %518, %516 : vector<8x1xf32>
      %520 = arith.addf %519, %236 : vector<8x1xf32>
      %521 = arith.mulf %520, %516 : vector<8x1xf32>
      %522 = arith.addf %521, %317 : vector<8x1xf32>
      %cst_97 = arith.constant 2.000000e+00 : f32
      %523 = vector.broadcast %cst_97 : f32 to vector<8x1xf32>
      %524 = arith.mulf %523, %517 : vector<8x1xf32>
      %525 = arith.mulf %524, %516 : vector<8x1xf32>
      %526 = arith.addf %525, %519 : vector<8x1xf32>
      %527 = arith.addf %526, %520 : vector<8x1xf32>
      %528 = math.absf %527 : vector<8x1xf32>
      %cst_98 = arith.constant 9.99999993E-9 : f32
      %529 = vector.broadcast %cst_98 : f32 to vector<8x1xf32>
      %530 = arith.cmpf ogt, %528, %529 : vector<8x1xf32>
      %cst_99 = arith.constant 0.000000e+00 : f32
      %531 = vector.broadcast %cst_99 : f32 to vector<8x1xf32>
      %532 = arith.cmpf oge, %527, %531 : vector<8x1xf32>
      %cst_100 = arith.constant 9.99999993E-9 : f32
      %cst_101 = arith.constant -9.99999993E-9 : f32
      %533 = vector.broadcast %cst_100 : f32 to vector<8x1xf32>
      %534 = vector.broadcast %cst_101 : f32 to vector<8x1xf32>
      %535 = arith.select %532, %533, %534 : vector<8x1xi1>, vector<8x1xf32>
      %536 = arith.select %530, %527, %535 : vector<8x1xi1>, vector<8x1xf32>
      %537 = arith.divf %522, %536 : vector<8x1xf32>
      %538 = arith.subf %516, %537 : vector<8x1xf32>
      %c10_i32 = arith.constant 10 : i32
      %539 = arith.mulf %538, %538 : vector<8x1xf32>
      %540 = arith.addf %539, %220 : vector<8x1xf32>
      %541 = arith.mulf %540, %538 : vector<8x1xf32>
      %542 = arith.addf %541, %236 : vector<8x1xf32>
      %543 = arith.mulf %542, %538 : vector<8x1xf32>
      %544 = arith.addf %543, %317 : vector<8x1xf32>
      %cst_102 = arith.constant 2.000000e+00 : f32
      %545 = vector.broadcast %cst_102 : f32 to vector<8x1xf32>
      %546 = arith.mulf %545, %539 : vector<8x1xf32>
      %547 = arith.mulf %546, %538 : vector<8x1xf32>
      %548 = arith.addf %547, %541 : vector<8x1xf32>
      %549 = arith.addf %548, %542 : vector<8x1xf32>
      %550 = math.absf %549 : vector<8x1xf32>
      %cst_103 = arith.constant 9.99999993E-9 : f32
      %551 = vector.broadcast %cst_103 : f32 to vector<8x1xf32>
      %552 = arith.cmpf ogt, %550, %551 : vector<8x1xf32>
      %cst_104 = arith.constant 0.000000e+00 : f32
      %553 = vector.broadcast %cst_104 : f32 to vector<8x1xf32>
      %554 = arith.cmpf oge, %549, %553 : vector<8x1xf32>
      %cst_105 = arith.constant 9.99999993E-9 : f32
      %cst_106 = arith.constant -9.99999993E-9 : f32
      %555 = vector.broadcast %cst_105 : f32 to vector<8x1xf32>
      %556 = vector.broadcast %cst_106 : f32 to vector<8x1xf32>
      %557 = arith.select %554, %555, %556 : vector<8x1xi1>, vector<8x1xf32>
      %558 = arith.select %552, %549, %557 : vector<8x1xi1>, vector<8x1xf32>
      %559 = arith.divf %544, %558 : vector<8x1xf32>
      %560 = arith.subf %538, %559 : vector<8x1xf32>
      %c11_i32 = arith.constant 11 : i32
      %561 = arith.mulf %560, %560 : vector<8x1xf32>
      %562 = arith.addf %561, %220 : vector<8x1xf32>
      %563 = arith.mulf %562, %560 : vector<8x1xf32>
      %564 = arith.addf %563, %236 : vector<8x1xf32>
      %565 = arith.mulf %564, %560 : vector<8x1xf32>
      %566 = arith.addf %565, %317 : vector<8x1xf32>
      %cst_107 = arith.constant 2.000000e+00 : f32
      %567 = vector.broadcast %cst_107 : f32 to vector<8x1xf32>
      %568 = arith.mulf %567, %561 : vector<8x1xf32>
      %569 = arith.mulf %568, %560 : vector<8x1xf32>
      %570 = arith.addf %569, %563 : vector<8x1xf32>
      %571 = arith.addf %570, %564 : vector<8x1xf32>
      %572 = math.absf %571 : vector<8x1xf32>
      %cst_108 = arith.constant 9.99999993E-9 : f32
      %573 = vector.broadcast %cst_108 : f32 to vector<8x1xf32>
      %574 = arith.cmpf ogt, %572, %573 : vector<8x1xf32>
      %cst_109 = arith.constant 0.000000e+00 : f32
      %575 = vector.broadcast %cst_109 : f32 to vector<8x1xf32>
      %576 = arith.cmpf oge, %571, %575 : vector<8x1xf32>
      %cst_110 = arith.constant 9.99999993E-9 : f32
      %cst_111 = arith.constant -9.99999993E-9 : f32
      %577 = vector.broadcast %cst_110 : f32 to vector<8x1xf32>
      %578 = vector.broadcast %cst_111 : f32 to vector<8x1xf32>
      %579 = arith.select %576, %577, %578 : vector<8x1xi1>, vector<8x1xf32>
      %580 = arith.select %574, %571, %579 : vector<8x1xi1>, vector<8x1xf32>
      %581 = arith.divf %566, %580 : vector<8x1xf32>
      %582 = arith.subf %560, %581 : vector<8x1xf32>
      %cst_112 = arith.constant 1.000000e+00 : f32
      %583 = vector.broadcast %cst_112 : f32 to vector<8x1xf32>
      %584 = arith.subf %583, %582 : vector<8x1xf32>
      %585 = arith.mulf %183, %584 : vector<8x1xf32>
      %cst_113 = arith.constant 0.000000e+00 : f32
      %586 = vector.broadcast %cst_113 : f32 to vector<8x1xf32>
      %587 = arith.maximumf %585, %586 : vector<8x1xf32>
      %588 = arith.mulf %587, %127 : vector<8x1xf32>
      %589 = vector.shape_cast %588 : vector<8x1xf32> to vector<8x1xf32>
      %590 = vector.broadcast %589 : vector<8x1xf32> to vector<8x128xf32>
      %c0_114 = arith.constant 0 : index
      %c0_115 = arith.constant 0 : index
      %591 = vector.load %arg5[%c0_114, %c0_115] : memref<8x128xf32, #tpu.memory_space<vmem>>, vector<8x128xf32>
      tpu.vector_store %arg5[%c0_114, %c0_115], %590 {strides = array<i32>} : memref<8x128xf32, #tpu.memory_space<vmem>>, vector<8x128xf32>,
    } else {
    }
    return
  }
  func.func @transform_0(%arg0: i32, %arg1: i32) -> (i32, i32, i32) {
    %c0_i32 = arith.constant 0 : i32
    %c0_i32_0 = arith.constant 0 : i32
    return %c0_i32, %arg0, %arg1 : i32, i32, i32
  }
  func.func @transform_1(%arg0: i32, %arg1: i32) -> (i32, i32, i32) {
    %c0_i32 = arith.constant 0 : i32
    %c0_i32_0 = arith.constant 0 : i32
    return %c0_i32, %arg0, %arg1 : i32, i32, i32
  }
  func.func @transform_2(%arg0: i32, %arg1: i32) -> (i32, i32) {
    %c0_i32 = arith.constant 0 : i32
    %c0_i32_0 = arith.constant 0 : i32
    return %arg0, %c0_i32 : i32, i32
  }
  func.func @transform_3(%arg0: i32, %arg1: i32) -> (i32, i32) {
    %c0_i32 = arith.constant 0 : i32
    %c0_i32_0 = arith.constant 0 : i32
    return %arg0, %c0_i32 : i32, i32
  }
}

</mosaic_0001>

<llo_original>
// kernel: coords2rmsd.2
$region0: #{coords2rmsd.2}
  #allocation0 [shape = 'u32[]', space=smem, size = 0x4, offset = 0x4, fixed_abs, tag = 'smem constant byte address 0x4 - core index']
  #allocation1 [shape = 'u32[144,128]{1,0:T(1,128)}', space=vmem, size = 0x12000, scoped, tag = 'internal scratch']
  #allocation2 [shape = 'f32[8,24]{1,0:T(8,128)}', space=vmem, size = 0x1000, scoped, tag = 'scratch operand']
  #allocation3 [shape = 'u32[2048]{0}', space=vmem, size = 0x2000, scoped, tag = 'scoped memory for coords2rmsd.2']
  #allocation4 [shape = 'u32[2048]{0}', space=vmem, size = 0x2000, scoped, tag = 'scoped memory for coords2rmsd.2']
  #allocation5 [shape = 'u32[2048]{0}', space=vmem, size = 0x2000, scoped, tag = 'scoped memory for coords2rmsd.2']
  #allocation6 [shape = 'u32[2048]{0}', space=vmem, size = 0x2000, scoped, tag = 'scoped memory for coords2rmsd.2']
  #allocation7 [shape = 'u32[2048]{0}', space=vmem, size = 0x2000, scoped, tag = 'scoped memory for coords2rmsd.2']
  #allocation8 [shape = 'u32[2048]{0}', space=vmem, size = 0x2000, scoped, tag = 'scoped memory for coords2rmsd.2']
  #allocation9 [shape = 'u32[2048]{0}', space=vmem, size = 0x2000, scoped, tag = 'scoped memory for coords2rmsd.2']
  #allocation10 [shape = 'u32[2048]{0}', space=vmem, size = 0x2000, scoped, tag = 'scoped memory for coords2rmsd.2']
  #allocation11 [shape = 'u32[2048]{0}', space=vmem, size = 0x2000, scoped, tag = 'scoped memory for coords2rmsd.2']
  #allocation12 [shape = 'u32[2048]{0}', space=vmem, size = 0x2000, scoped, tag = 'scoped memory for coords2rmsd.2']
  %s0 = inlined_call_operand.vmem [shape: s32[16,1], index: 0, kind: input, shape index: {}]
  %s1 = inlined_call_operand.vmem [shape: f32[3,10,16], index: 1, kind: input, shape index: {}]
  %s2 = inlined_call_operand.<no memory space> [shape: f32[], index: 2, kind: input, shape index: {}]
  %s3 = inlined_call_operand.vmem [shape: f32[3,10,16], index: 3, kind: input, shape index: {}]
  %s4 = inlined_call_operand.vmem [shape: f32[16,128], index: 4, kind: output, shape index: {}]
  %s5 = sld [smem:[#allocation0]]
  $region53: #{coords2rmsd.2} parent=0
    _
  %s7 = ssub.s32 1, %s5
  %s8 = scalar_select 0, %s7, %s5
  %v9 = vstv %s2
  %v10 = vstv %s2
  loop: start=0, step=1, limit=4
  $region2: #{coords2rmsd.2} parent=0 // loop_pre_header
    _
  $region3: #{coords2rmsd.2} parent=0 // loop_header
    %s12 = sphi 0, %s16
    %p13 = scmp.ge.s32.totalorder %s12, 4
    %s19 = sphi 0, %s31
    %s20 = sphi 0, %s27
    %s21 = sphi 0, %s19
    %s22 = sphi 0, %s20
    %s23 = sphi 0, %s21
    %s24 = sphi 0, %s22
    %s36 = sphi 0, %s38
    %s39 = sphi 0, %s36
    %s40 = sphi 0, %s39
    %s56 = sphi 0, %s40
    %s64 = sphi 0, %s66
    %s67 = sphi 0, %s64
    %s68 = sphi 0, %s67
    %s84 = sphi 0, %s68
    %s90 = sphi 0, %s92
    %s93 = sphi 0, %s90
    %s94 = sphi 0, %s93
    %s110 = sphi 0, %s94
    %s116 = sphi 0, %s118
    %s119 = sphi 0, %s116
    %s120 = sphi 0, %s119
    %s136 = sphi 0, %s120
  $region4: #{coords2rmsd.2} parent=0 // loop_header_branch
    %15 = sbr.rel (%p13) target = $region8
  $region5: #{coords2rmsd.2} parent=0 // loop_body
    %s17 = ssub.s32 %s12, 1
    %s18 = ssub.s32 %s12, 2
    %s25 = sadd.s32 1, %s20
    %p26 = scmp.ge.s32.totalorder %s25, 1
    %s27 = scalar_select %p26, 0, %s25
    %s28 = sadd.s32 1, %s19
    %s29 = scalar_select %p26, %s28, %s19
    %p30 = scmp.ge.s32.totalorder %s29, 2
    %s31 = scalar_select %p30, 0, %s29
    %s32 = ssub.s32 %s19, %s31
    %s33 = ssub.s32 %s20, %s27
    %s34 = sor.u32 %s32, %s33
    %p35 = scmp.eq.s32.totalorder %s34, 0
    %s37 = sadd.s32 %s36, 1
    %s38 = scalar_select %p35, %s36, %s37
    %p41 = pneg %p35
    %p42 = scmp.eq.s32.totalorder %s12, 1
    %p43 = por %p41, %p42
    %p44 = scmp.ne.s32.totalorder %s36, %s39
    %p45 = scmp.eq.s32.totalorder %s12, 0
    %p46 = por %p44, %p45
    %p47 = scmp.ne.s32.totalorder %s36, %s39
    %p48 = scmp.eq.s32.totalorder %s17, 1
    %p49 = por %p47, %p48
    %p50 = scmp.ne.s32.totalorder %s39, %s40
    %p51 = scmp.eq.s32.totalorder %s17, 0
    %p52 = por %p50, %p51
    %p53 = scmp.ne.s32.totalorder %s39, %s40
    %p54 = scmp.eq.s32.totalorder %s18, 1
    %p55 = por %p53, %p54
    %p57 = scmp.ne.s32.totalorder %s40, %s56
    %p58 = scmp.eq.s32.totalorder %s18, 0
    %p59 = por %p57, %p58
    %s60 = ssub.s32 %s19, %s31
    %s61 = ssub.s32 %s20, %s27
    %s62 = sor.u32 %s60, %s61
    %p63 = scmp.eq.s32.totalorder %s62, 0
    %s65 = sadd.s32 %s64, 1
    %s66 = scalar_select %p63, %s64, %s65
    %p69 = pneg %p63
    %p70 = scmp.eq.s32.totalorder %s12, 1
    %p71 = por %p69, %p70
    %p72 = scmp.ne.s32.totalorder %s64, %s67
    %p73 = scmp.eq.s32.totalorder %s12, 0
    %p74 = por %p72, %p73
    %p75 = scmp.ne.s32.totalorder %s64, %s67
    %p76 = scmp.eq.s32.totalorder %s17, 1
    %p77 = por %p75, %p76
    %p78 = scmp.ne.s32.totalorder %s67, %s68
    %p79 = scmp.eq.s32.totalorder %s17, 0
    %p80 = por %p78, %p79
    %p81 = scmp.ne.s32.totalorder %s67, %s68
    %p82 = scmp.eq.s32.totalorder %s18, 1
    %p83 = por %p81, %p82
    %p85 = scmp.ne.s32.totalorder %s68, %s84
    %p86 = scmp.eq.s32.totalorder %s18, 0
    %p87 = por %p85, %p86
    %s88 = ssub.s32 %s19, %s31
    %p89 = scmp.eq.s32.totalorder %s88, 0
    %s91 = sadd.s32 %s90, 1
    %s92 = scalar_select %p89, %s90, %s91
    %p95 = pneg %p89
    %p96 = scmp.eq.s32.totalorder %s12, 1
    %p97 = por %p95, %p96
    %p98 = scmp.ne.s32.totalorder %s90, %s93
    %p99 = scmp.eq.s32.totalorder %s12, 0
    %p100 = por %p98, %p99
    %p101 = scmp.ne.s32.totalorder %s90, %s93
    %p102 = scmp.eq.s32.totalorder %s17, 1
    %p103 = por %p101, %p102
    %p104 = scmp.ne.s32.totalorder %s93, %s94
    %p105 = scmp.eq.s32.totalorder %s17, 0
    %p106 = por %p104, %p105
    %p107 = scmp.ne.s32.totalorder %s93, %s94
    %p108 = scmp.eq.s32.totalorder %s18, 1
    %p109 = por %p107, %p108
    %p111 = scmp.ne.s32.totalorder %s94, %s110
    %p112 = scmp.eq.s32.totalorder %s18, 0
    %p113 = por %p111, %p112
    %s114 = ssub.s32 %s19, %s31
    %p115 = scmp.eq.s32.totalorder %s114, 0
    %s117 = sadd.s32 %s116, 1
    %s118 = scalar_select %p115, %s116, %s117
    %p121 = pneg %p115
    %p122 = scmp.eq.s32.totalorder %s12, 1
    %p123 = por %p121, %p122
    %p124 = scmp.ne.s32.totalorder %s116, %s119
    %p125 = scmp.eq.s32.totalorder %s12, 0
    %p126 = por %p124, %p125
    %p127 = scmp.ne.s32.totalorder %s116, %s119
    %p128 = scmp.eq.s32.totalorder %s17, 1
    %p129 = por %p127, %p128
    %p130 = scmp.ne.s32.totalorder %s119, %s120
    %p131 = scmp.eq.s32.totalorder %s17, 0
    %p132 = por %p130, %p131
    %p133 = scmp.ne.s32.totalorder %s119, %s120
    %p134 = scmp.eq.s32.totalorder %s18, 1
    %p135 = por %p133, %p134
    %p137 = scmp.ne.s32.totalorder %s120, %s136
    %p138 = scmp.eq.s32.totalorder %s18, 0
    %p139 = por %p137, %p138
    %p140 = scmp.le.s32.totalorder 1, %s12
    %p141 = scmp.lt.s32.totalorder %s12, 3
    %p142 = pnand %p140, %p141
    %p143 = pneg %p142
    // Predicated region
    $region9: #{coords2rmsd.2} parent=5 // pred_check
      _
    $region10: #{coords2rmsd.2} parent=5 // pred_check_branch
      %145 = sbr.rel (%p142) target = $region12
    $region11: #{coords2rmsd.2} parent=5 // pred_region
      %s146 = ssub.s32 %s12, 1
    $region12: #{coords2rmsd.2} parent=5 // pred_fallthru
      _
    %p147 = scmp.lt.s32.totalorder %s12, 2
    // Predicated region
    $region13: #{coords2rmsd.2} parent=5 // pred_check
      %p148 = pneg %p147
    $region14: #{coords2rmsd.2} parent=5 // pred_check_branch
      %150 = sbr.rel (%p148) target = $region16
    $region15: #{coords2rmsd.2} parent=5 // pred_region
      // Predicated region
      $region17: #{coords2rmsd.2} parent=15 // pred_check
        %p151 = pneg %p46
      $region18: #{coords2rmsd.2} parent=15 // pred_check_branch
        %153 = sbr.rel (%p151) target = $region20
      $region19: #{coords2rmsd.2} parent=15 // pred_region
        %s154 = ssub.s32 2, %s19
        %p155 = scmp.lt.s32.totalorder %s154, 1
        %s156 = scalar_select %p155, %s154, 1
        %s157 = smul.u32 384, %s156
        %s158 = ssub.s32 1, %s20
        %s159 = smul.u32 %s157, %s158
        %p160 = scmp.lt.s32.totalorder %s19, 1
        %s161 = scalar_select %p160, %s19, 1
        %p162 = scmp.lt.s32.totalorder %s20, 0
        %s163 = scalar_select %p162, %s20, 0
        %s164 = sadd.s32 %s163, %s161
        %s165 = smul.addr %s164, 8
        %s166 = scalar_lea.vmem %s3, %s165
        %s167 = ssub.s32 2, %s19
        %p168 = scmp.lt.s32.totalorder %s167, 1
        %s169 = scalar_select %p168, %s167, 1
        %s170 = smul.u32 384, %s169
        %s171 = ssub.s32 1, %s20
        %s172 = smul.u32 %s170, %s171
      $region20: #{coords2rmsd.2} parent=15 // pred_fallthru
        _
      // Predicated region
      $region21: #{coords2rmsd.2} parent=15 // pred_check
        %p173 = pneg %p74
      $region22: #{coords2rmsd.2} parent=15 // pred_check_branch
        %175 = sbr.rel (%p173) target = $region24
      $region23: #{coords2rmsd.2} parent=15 // pred_region
        %s176 = ssub.s32 2, %s19
        %p177 = scmp.lt.s32.totalorder %s176, 1
        %s178 = scalar_select %p177, %s176, 1
        %s179 = smul.u32 384, %s178
        %s180 = ssub.s32 1, %s20
        %s181 = smul.u32 %s179, %s180
        %p182 = scmp.lt.s32.totalorder %s19, 1
        %s183 = scalar_select %p182, %s19, 1
        %p184 = scmp.lt.s32.totalorder %s20, 0
        %s185 = scalar_select %p184, %s20, 0
        %s186 = sadd.s32 %s185, %s183
        %s187 = smul.addr %s186, 8
        %s188 = scalar_lea.vmem %s1, %s187
        %s189 = ssub.s32 2, %s19
        %p190 = scmp.lt.s32.totalorder %s189, 1
        %s191 = scalar_select %p190, %s189, 1
        %s192 = smul.u32 384, %s191
        %s193 = ssub.s32 1, %s20
        %s194 = smul.u32 %s192, %s193
      $region24: #{coords2rmsd.2} parent=15 // pred_fallthru
        _
      // Predicated region
      $region25: #{coords2rmsd.2} parent=15 // pred_check
        %p195 = pneg %p100
      $region26: #{coords2rmsd.2} parent=15 // pred_check_branch
        %197 = sbr.rel (%p195) target = $region28
      $region27: #{coords2rmsd.2} parent=15 // pred_region
        %p198 = scmp.lt.s32.totalorder %s19, 1
        %s199 = scalar_select %p198, %s19, 1
        %s200 = smul.addr %s199, 8
        %s201 = scalar_lea.vmem %s0, %s200
      $region28: #{coords2rmsd.2} parent=15 // pred_fallthru
        _
    $region16: #{coords2rmsd.2} parent=5 // pred_fallthru
      _
    %p202 = scmp.le.s32.totalorder 1, %s12
    %p203 = scmp.lt.s32.totalorder %s12, 3
    %p204 = pnand %p202, %p203
    %p205 = pneg %p204
    // Predicated region
    $region29: #{coords2rmsd.2} parent=5 // pred_check
      _
    $region30: #{coords2rmsd.2} parent=5 // pred_check_branch
      %207 = sbr.rel (%p204) target = $region32
    $region31: #{coords2rmsd.2} parent=5 // pred_region
      #allocation13 [shape = 'u8[12288]{0}', space=vmem, size = 0x3000, dematerialized = true, scoped, tag = 'FusionAdapter Buffer %fusion.2 = f32[3,16,128]{2,1,0:T(8,128)} fusion(%param_3.1, %param_2.2), kind=kLoop, calls=%fused_computation.2.clone, metadata={op_name="jit(coords2rmsd)/jit(_pad)/pad" stack_frame_id=11}']
      #allocation14 [shape = 'u8[12288]{0}', space=vmem, size = 0x3000, dematerialized = true, scoped, tag = 'FusionAdapter Buffer %fusion.1 = f32[3,16,128]{2,1,0:T(8,128)} fusion(%param_1.3, %param_2.2), kind=kLoop, calls=%fused_computation.1.clone, metadata={op_name="jit(coords2rmsd)/jit(_pad)/pad" stack_frame_id=16}']
      %s208 = ssub.s32 %s12, 1
      %s209 = ssub.s32 2, %s21
      %p210 = scmp.lt.s32.totalorder %s209, 1
      %s211 = scalar_select %p210, %s209, 1
      %s212 = smul.u32 384, %s211
      %s213 = ssub.s32 1, %s22
      %s214 = smul.u32 %s212, %s213
      %p215 = scmp.lt.s32.totalorder %s21, 1
      %s216 = scalar_select %p215, %s21, 1
      %p217 = scmp.lt.s32.totalorder %s22, 0
      %s218 = scalar_select %p217, %s22, 0
      %s219 = sadd.s32 %s218, %s216
      %s220 = smul.addr %s219, 8
      %s221 = scalar_lea.vmem %s3, %s220
      %p222 = pneg %p52
      %p223 = pneg %p49
      %s224 = ssub.s32 2, %s21
      %p225 = scmp.lt.s32.totalorder %s224, 1
      %s226 = scalar_select %p225, %s224, 1
      %s227 = smul.u32 384, %s226
      %s228 = ssub.s32 1, %s22
      %s229 = smul.u32 %s227, %s228
      %p230 = scmp.lt.s32.totalorder %s21, 1
      %s231 = scalar_select %p230, %s21, 1
      %p232 = scmp.lt.s32.totalorder %s22, 0
      %s233 = scalar_select %p232, %s22, 0
      %s234 = sadd.s32 %s233, %s231
      %s235 = smul.addr %s234, 8
      %s236 = scalar_lea.vmem %s1, %s235
      %p237 = pneg %p80
      %p238 = pneg %p77
      %p239 = scmp.lt.s32.totalorder %s21, 1
      %s240 = scalar_select %p239, %s21, 1
      %s241 = smul.addr %s240, 8
      %s242 = scalar_lea.vmem %s0, %s241
      %p243 = pneg %p106
      %p244 = pneg %p103
      %p245 = pneg %p132
      %p246 = pneg %p129
      %p247 = scmp.lt.s32.totalorder %s21, 1
      %s248 = scalar_select %p247, %s21, 1
      %s249 = smul.addr %s248, 8
      %s250 = scalar_lea.vmem %s4, %s249
      %s251 = ssub.s32 2, %s21
      %p252 = scmp.lt.s32.totalorder %s251, 1
      %s253 = scalar_select %p252, %s251, 1
      %s254 = smul.u32 384, %s253
      %s255 = ssub.s32 1, %s22
      %s256 = smul.u32 %s254, %s255
      %p257 = scmp.lt.s32.totalorder %s21, 1
      %s258 = scalar_select %p257, %s21, 1
      %p259 = scmp.lt.s32.totalorder %s22, 0
      %s260 = scalar_select %p259, %s22, 0
      %s261 = sadd.s32 %s260, %s258
      %s262 = smul.addr %s261, 8
      %s263 = scalar_lea.vmem %s3, %s262
      %s264 = ssub.s32 2, %s21
      %p265 = scmp.lt.s32.totalorder %s264, 1
      %s266 = scalar_select %p265, %s264, 1
      %s267 = smul.u32 384, %s266
      %s268 = ssub.s32 1, %s22
      %s269 = smul.u32 %s267, %s268
      %s270 = ssub.s32 2, %s21
      %p271 = scmp.lt.s32.totalorder %s270, 1
      %s272 = scalar_select %p271, %s270, 1
      %s273 = smul.u32 384, %s272
      %s274 = ssub.s32 1, %s22
      %s275 = smul.u32 %s273, %s274
      %p276 = scmp.lt.s32.totalorder %s21, 1
      %s277 = scalar_select %p276, %s21, 1
      %p278 = scmp.lt.s32.totalorder %s22, 0
      %s279 = scalar_select %p278, %s22, 0
      %s280 = sadd.s32 %s279, %s277
      %s281 = smul.addr %s280, 8
      %s282 = scalar_lea.vmem %s1, %s281
      %s283 = ssub.s32 2, %s21
      %p284 = scmp.lt.s32.totalorder %s283, 1
      %s285 = scalar_select %p284, %s283, 1
      %s286 = smul.u32 384, %s285
      %s287 = ssub.s32 1, %s22
      %s288 = smul.u32 %s286, %s287
      %p289 = scmp.lt.s32.totalorder %s21, 1
      %s290 = scalar_select %p289, %s21, 1
      %s291 = smul.addr %s290, 8
      %s292 = scalar_lea.vmem %s0, %s291
      %p293 = scmp.lt.s32.totalorder %s21, 1
      %s294 = scalar_select %p293, %s21, 1
      %s295 = smul.addr %s294, 8
      %s296 = scalar_lea.vmem %s4, %s295
      %s297 = ssub.s32 1, %s21
      %s298 = ssub.s32 0, %s22
      %s299 = sor.u32 %s297, %s298
      %p300 = scmp.lt.s32.totalorder %s299, 0
      %s301 = scalar_select %p300, 0, 255
      %v302 = vld [vmem:[%s263] sm:%s301]
      %s303 = ssub.s32 1, %s21
      %s304 = ssub.s32 0, %s22
      %s305 = sor.u32 %s303, %s304
      %v306 = vstv %s305
      %vm307 = vcmp.lt.s32.totalorder %v306, 0
      %v308 = vsel %vm307, %v9, %v302
      %s309 = smul.addr %s21, 8
      %v310 = vlaneseq
      %v311 = vshrl.u32 %v310, 7
      %v312 = vstv %s309
      %v313 = vadd.s32 %v311, %v312
      %vm314 = vcmp.lt.s32.totalorder %v313, 10
      %v315 = vsel %vm314, %v308, %v9
      %s316 = smul.addr %s22, 128
      %v317 = vlaneseq
      %v318 = vand.u32 %v317, 127
      %v319 = vstv %s316
      %v320 = vadd.s32 %v318, %v319
      %vm321 = vcmp.lt.s32.totalorder %v320, 16
      %v322 = vsel %vm321, %v315, %v9
      %324 = vst [vmem:[#allocation13] sm:$0xff] %v322
      %s325 = scalar_lea.vmem %s263, 16
      %s326 = ssub.s32 1, %s21
      %s327 = ssub.s32 0, %s22
      %s328 = sor.u32 %s326, %s327
      %p329 = scmp.lt.s32.totalorder %s328, 0
      %s330 = scalar_select %p329, 0, 255
      %v331 = vld [vmem:[%s325] sm:%s330]
      %s332 = ssub.s32 1, %s21
      %s333 = ssub.s32 0, %s22
      %s334 = sor.u32 %s332, %s333
      %v335 = vstv %s334
      %vm336 = vcmp.lt.s32.totalorder %v335, 0
      %v337 = vsel %vm336, %v9, %v331
      %s338 = smul.addr %s21, 8
      %v339 = vlaneseq
      %v340 = vshrl.u32 %v339, 7
      %v341 = vstv %s338
      %v342 = vadd.s32 %v340, %v341
      %vm343 = vcmp.lt.s32.totalorder %v342, 10
      %v344 = vsel %vm343, %v337, %v9
      %s345 = smul.addr %s22, 128
      %v346 = vlaneseq
      %v347 = vand.u32 %v346, 127
      %v348 = vstv %s345
      %v349 = vadd.s32 %v347, %v348
      %vm350 = vcmp.lt.s32.totalorder %v349, 16
      %v351 = vsel %vm350, %v344, %v9
      %s352 = scalar_lea.vmem [#allocation13], 8
      %354 = vst [vmem:[%s352] sm:$0xff] %v351
      %s355 = scalar_lea.vmem %s263, 32
      %s356 = ssub.s32 1, %s21
      %s357 = ssub.s32 0, %s22
      %s358 = sor.u32 %s356, %s357
      %p359 = scmp.lt.s32.totalorder %s358, 0
      %s360 = scalar_select %p359, 0, 255
      %v361 = vld [vmem:[%s355] sm:%s360]
      %s362 = ssub.s32 1, %s21
      %s363 = ssub.s32 0, %s22
      %s364 = sor.u32 %s362, %s363
      %v365 = vstv %s364
      %vm366 = vcmp.lt.s32.totalorder %v365, 0
      %v367 = vsel %vm366, %v9, %v361
      %s368 = smul.addr %s21, 8
      %v369 = vlaneseq
      %v370 = vshrl.u32 %v369, 7
      %v371 = vstv %s368
      %v372 = vadd.s32 %v370, %v371
      %vm373 = vcmp.lt.s32.totalorder %v372, 10
      %v374 = vsel %vm373, %v367, %v9
      %s375 = smul.addr %s22, 128
      %v376 = vlaneseq
      %v377 = vand.u32 %v376, 127
      %v378 = vstv %s375
      %v379 = vadd.s32 %v377, %v378
      %vm380 = vcmp.lt.s32.totalorder %v379, 16
      %v381 = vsel %vm380, %v374, %v9
      %s382 = scalar_lea.vmem [#allocation13], 16
      %384 = vst [vmem:[%s382] sm:$0xff] %v381
      %s385 = ssub.s32 1, %s21
      %s386 = ssub.s32 0, %s22
      %s387 = sor.u32 %s385, %s386
      %p388 = scmp.lt.s32.totalorder %s387, 0
      %s389 = scalar_select %p388, 0, 255
      %v390 = vld [vmem:[%s282] sm:%s389]
      %s391 = ssub.s32 1, %s21
      %s392 = ssub.s32 0, %s22
      %s393 = sor.u32 %s391, %s392
      %v394 = vstv %s393
      %vm395 = vcmp.lt.s32.totalorder %v394, 0
      %v396 = vsel %vm395, %v10, %v390
      %s397 = smul.addr %s21, 8
      %v398 = vlaneseq
      %v399 = vshrl.u32 %v398, 7
      %v400 = vstv %s397
      %v401 = vadd.s32 %v399, %v400
      %vm402 = vcmp.lt.s32.totalorder %v401, 10
      %v403 = vsel %vm402, %v396, %v10
      %s404 = smul.addr %s22, 128
      %v405 = vlaneseq
      %v406 = vand.u32 %v405, 127
      %v407 = vstv %s404
      %v408 = vadd.s32 %v406, %v407
      %vm409 = vcmp.lt.s32.totalorder %v408, 16
      %v410 = vsel %vm409, %v403, %v10
      %412 = vst [vmem:[#allocation14] sm:$0xff] %v410
      %s413 = scalar_lea.vmem %s282, 16
      %s414 = ssub.s32 1, %s21
      %s415 = ssub.s32 0, %s22
      %s416 = sor.u32 %s414, %s415
      %p417 = scmp.lt.s32.totalorder %s416, 0
      %s418 = scalar_select %p417, 0, 255
      %v419 = vld [vmem:[%s413] sm:%s418]
      %s420 = ssub.s32 1, %s21
      %s421 = ssub.s32 0, %s22
      %s422 = sor.u32 %s420, %s421
      %v423 = vstv %s422
      %vm424 = vcmp.lt.s32.totalorder %v423, 0
      %v425 = vsel %vm424, %v10, %v419
      %s426 = smul.addr %s21, 8
      %v427 = vlaneseq
      %v428 = vshrl.u32 %v427, 7
      %v429 = vstv %s426
      %v430 = vadd.s32 %v428, %v429
      %vm431 = vcmp.lt.s32.totalorder %v430, 10
      %v432 = vsel %vm431, %v425, %v10
      %s433 = smul.addr %s22, 128
      %v434 = vlaneseq
      %v435 = vand.u32 %v434, 127
      %v436 = vstv %s433
      %v437 = vadd.s32 %v435, %v436
      %vm438 = vcmp.lt.s32.totalorder %v437, 16
      %v439 = vsel %vm438, %v432, %v10
      %s440 = scalar_lea.vmem [#allocation14], 8
      %442 = vst [vmem:[%s440] sm:$0xff] %v439
      %s443 = scalar_lea.vmem %s282, 32
      %s444 = ssub.s32 1, %s21
      %s445 = ssub.s32 0, %s22
      %s446 = sor.u32 %s444, %s445
      %p447 = scmp.lt.s32.totalorder %s446, 0
      %s448 = scalar_select %p447, 0, 255
      %v449 = vld [vmem:[%s443] sm:%s448]
      %s450 = ssub.s32 1, %s21
      %s451 = ssub.s32 0, %s22
      %s452 = sor.u32 %s450, %s451
      %v453 = vstv %s452
      %vm454 = vcmp.lt.s32.totalorder %v453, 0
      %v455 = vsel %vm454, %v10, %v449
      %s456 = smul.addr %s21, 8
      %v457 = vlaneseq
      %v458 = vshrl.u32 %v457, 7
      %v459 = vstv %s456
      %v460 = vadd.s32 %v458, %v459
      %vm461 = vcmp.lt.s32.totalorder %v460, 10
      %v462 = vsel %vm461, %v455, %v10
      %s463 = smul.addr %s22, 128
      %v464 = vlaneseq
      %v465 = vand.u32 %v464, 127
      %v466 = vstv %s463
      %v467 = vadd.s32 %v465, %v466
      %vm468 = vcmp.lt.s32.totalorder %v467, 16
      %v469 = vsel %vm468, %v462, %v10
      %s470 = scalar_lea.vmem [#allocation14], 16
      %472 = vst [vmem:[%s470] sm:$0xff] %v469
      %v473 = vld [vmem:[#allocation13] sm:$0xff]
      %v474 = vld [vmem:[#allocation13 + $0x8] sm:$0xff]
      %v475 = vld [vmem:[#allocation13 + $0x10] sm:$0xff]
      %v476 = vld [vmem:[#allocation14] sm:$0xff]
      %v477 = vld [vmem:[#allocation14 + $0x8] sm:$0xff]
      %v478 = vld [vmem:[#allocation14 + $0x10] sm:$0xff]
      %v479 = vld [vmem:[%s292] sm:$0xff]
      %p480 = scmp.eq.s32.totalorder %s22, 0
      // Predicated region
      $region33: #{coords2rmsd.2} parent=31 // pred_check
        %p481 = pneg %p480
      $region34: #{coords2rmsd.2} parent=31 // pred_check_branch
        %483 = sbr.rel (%p481) target = $region36
      $region35: #{coords2rmsd.2} parent=31 // pred_region
        %vm484 = vcmask 130048
        %485 = vst.msk [vmem:[#allocation2] sm:$0xff] %vm484, 0.0
        %487 = vrot.lane.b32.xlu0 %v474, 1
        %v488 = vpop.permute.xlu0 %487
        %491 = vrot.lane.b32.xlu0 %v475, 2
        %v492 = vpop.permute.xlu0 %491
        %vm494 = vcmask 7168
        %v495 = vsel %vm494, %v473, %v488
        %vm496 = vcmask 15360
        %v497 = vsel %vm496, %v495, %v492
        %499 = vrot.lane.b32.xlu0 %v497, 16
        %v500 = vpop.permute.xlu0 %499
        %vm502 = vcmask 154752
        %503 = vst.msk [vmem:[#allocation2] sm:$0xff] %vm502, %v500
        %505 = vrot.lane.b32.xlu0 %v477, 1
        %v506 = vpop.permute.xlu0 %505
        %509 = vrot.lane.b32.xlu0 %v478, 2
        %v510 = vpop.permute.xlu0 %509
        %v512 = vsel %vm494, %v476, %v506
        %v513 = vsel %vm496, %v512, %v510
        %515 = vrot.lane.b32.xlu0 %v513, 19
        %v516 = vpop.permute.xlu0 %515
        %vm518 = vcmask 179352
        %519 = vst.msk [vmem:[#allocation2] sm:$0xff] %vm518, %v516
      $region36: #{coords2rmsd.2} parent=31 // pred_fallthru
        _
      %v520 = vld [vmem:[#allocation2] sm:$0xff]
      %v521 = vlaneseq
      %v522 = vand.u32 %v521, 127
      %s523 = smul.u32 %s22, 128
      %v524 = vstv %s523
      %v525 = vadd.s32 %v522, %v524
      %526 = vset.pattern.permute.xlu0 0
      %527 = vperm.xlu0 %526, %v479
      %v528 = vpop.permute.xlu0 %527
      %vm529 = vcmp.lt.s32.totalorder %v525, %v528
      %531 = vset.pattern.permute.xlu0 16
      %532 = vperm.xlu0 %531, %v520
      %v533 = vpop.permute.xlu0 %532
      %v535 = vsub.f32 %v473, %v533
      %v536 = vsel %vm529, %v535, 0.0
      %537 = vset.pattern.permute.xlu0 17
      %538 = vperm.xlu0 %537, %v520
      %v539 = vpop.permute.xlu0 %538
      %v541 = vsub.f32 %v474, %v539
      %v542 = vsel %vm529, %v541, 0.0
      %543 = vset.pattern.permute.xlu0 18
      %544 = vperm.xlu0 %543, %v520
      %v545 = vpop.permute.xlu0 %544
      %v547 = vsub.f32 %v475, %v545
      %v548 = vsel %vm529, %v547, 0.0
      %549 = vset.pattern.permute.xlu0 19
      %550 = vperm.xlu0 %549, %v520
      %v551 = vpop.permute.xlu0 %550
      %v553 = vsub.f32 %v476, %v551
      %v554 = vsel %vm529, %v553, 0.0
      %555 = vset.pattern.permute.xlu0 20
      %556 = vperm.xlu0 %555, %v520
      %v557 = vpop.permute.xlu0 %556
      %v559 = vsub.f32 %v477, %v557
      %v560 = vsel %vm529, %v559, 0.0
      %561 = vset.pattern.permute.xlu0 21
      %562 = vperm.xlu0 %561, %v520
      %v563 = vpop.permute.xlu0 %562
      %v565 = vsub.f32 %v478, %v563
      %v566 = vsel %vm529, %v565, 0.0
      %v567 = vmul.f32 %v536, %v554
      %568 = vadd.xlane.f32.xlu0 %v567
      %v569 = vpop.xlane.xlu0 %568
      %v570 = vmul.f32 %v536, %v560
      %571 = vadd.xlane.f32.xlu0 %v570
      %v572 = vpop.xlane.xlu0 %571
      %v573 = vmul.f32 %v536, %v566
      %574 = vadd.xlane.f32.xlu0 %v573
      %v575 = vpop.xlane.xlu0 %574
      %v576 = vmul.f32 %v542, %v554
      %577 = vadd.xlane.f32.xlu0 %v576
      %v578 = vpop.xlane.xlu0 %577
      %v579 = vmul.f32 %v542, %v560
      %580 = vadd.xlane.f32.xlu0 %v579
      %v581 = vpop.xlane.xlu0 %580
      %v582 = vmul.f32 %v542, %v566
      %583 = vadd.xlane.f32.xlu0 %v582
      %v584 = vpop.xlane.xlu0 %583
      %v585 = vmul.f32 %v548, %v554
      %586 = vadd.xlane.f32.xlu0 %v585
      %v587 = vpop.xlane.xlu0 %586
      %v588 = vmul.f32 %v548, %v560
      %589 = vadd.xlane.f32.xlu0 %v588
      %v590 = vpop.xlane.xlu0 %589
      %v591 = vmul.f32 %v548, %v566
      %592 = vadd.xlane.f32.xlu0 %v591
      %v593 = vpop.xlane.xlu0 %592
      %v594 = vmul.f32 %v536, %v536
      %v595 = vmul.f32 %v542, %v542
      %v596 = vadd.f32 %v594, %v595
      %v597 = vmul.f32 %v548, %v548
      %v598 = vadd.f32 %v596, %v597
      %v599 = vmul.f32 %v554, %v554
      %v600 = vadd.f32 %v598, %v599
      %v601 = vmul.f32 %v560, %v560
      %v602 = vadd.f32 %v600, %v601
      %v603 = vmul.f32 %v566, %v566
      %v604 = vadd.f32 %v602, %v603
      %605 = vadd.xlane.f32.xlu0 %v604
      %v606 = vpop.xlane.xlu0 %605
      %607 = vadd.xlane.f32.xlu0 %v536
      %v608 = vpop.xlane.xlu0 %607
      %609 = vadd.xlane.f32.xlu0 %v542
      %v610 = vpop.xlane.xlu0 %609
      %611 = vadd.xlane.f32.xlu0 %v548
      %v612 = vpop.xlane.xlu0 %611
      %613 = vadd.xlane.f32.xlu0 %v554
      %v614 = vpop.xlane.xlu0 %613
      %615 = vadd.xlane.f32.xlu0 %v560
      %v616 = vpop.xlane.xlu0 %615
      %617 = vadd.xlane.f32.xlu0 %v566
      %v618 = vpop.xlane.xlu0 %617
      %vm619 = vcmask 7168
      %v620 = vsel %vm619, %v569, %v572
      %vm621 = vcmask 15360
      %v622 = vsel %vm621, %v620, %v575
      %vm623 = vcmask 23552
      %v624 = vsel %vm623, %v622, %v578
      %vm625 = vcmask 31744
      %v626 = vsel %vm625, %v624, %v581
      %vm627 = vcmask 39936
      %v628 = vsel %vm627, %v626, %v584
      %vm629 = vcmask 48128
      %v630 = vsel %vm629, %v628, %v587
      %vm631 = vcmask 56320
      %v632 = vsel %vm631, %v630, %v590
      %vm633 = vcmask 64512
      %v634 = vsel %vm633, %v632, %v593
      %vm635 = vcmask 72704
      %v636 = vsel %vm635, %v634, %v606
      %vm637 = vcmask 80896
      %v638 = vsel %vm637, %v636, %v608
      %vm639 = vcmask 89088
      %v640 = vsel %vm639, %v638, %v610
      %vm641 = vcmask 97280
      %v642 = vsel %vm641, %v640, %v612
      %vm643 = vcmask 105472
      %v644 = vsel %vm643, %v642, %v614
      %vm645 = vcmask 113664
      %v646 = vsel %vm645, %v644, %v616
      %vm647 = vcmask 121856
      %v648 = vsel %vm647, %v646, %v618
      %v649 = vadd.f32 %v520, %v648
      %vm650 = vcmask 130048
      %651 = vst.msk [vmem:[#allocation2] sm:$0xff] %vm650, %v649
      // Predicated region
      $region37: #{coords2rmsd.2} parent=31 // pred_check
        %p652 = pneg %p480
      $region38: #{coords2rmsd.2} parent=31 // pred_check_branch
        %654 = sbr.rel (%p652) target = $region40
      $region39: #{coords2rmsd.2} parent=31 // pred_region
        %v655 = vld [vmem:[#allocation2] sm:$0xff]
        %v656 = vcvt.s32.f32 %v479
        %v657 = vmax.f32 %v656, 1.0
        %v658 = vrcp.pop %v657
        %v659 = vmul.f32 %v657, %v658
        %v660 = vsub.f32 2.0, %v659
        %v661 = vmul.f32 %v658, %v660
        %vm662 = vcmp.gt.s32.totalorder %v479, 0
        %v663 = vsel %vm662, %v661, 0.0
        %665 = vrot.lane.b32.xlu0 %v655, 125
        %v666 = vpop.permute.xlu0 %665
        %v668 = vmul.f32 %v655, %v666
        %670 = vrot.lane.b32.xlu0 %v663, 10
        %v671 = vpop.permute.xlu0 %670
        %v673 = vmul.f32 %v668, %v671
        %675 = vrot.lane.b32.xlu0 %v673, 118
        %v676 = vpop.permute.xlu0 %675
        %v678 = vsub.f32 %v655, %v676
        %679 = vrot.lane.b32.xlu0 %v655, 124
        %v680 = vpop.permute.xlu0 %679
        %v682 = vmul.f32 %v655, %v680
        %v683 = vmul.f32 %v682, %v671
        %685 = vrot.lane.b32.xlu0 %v683, 119
        %v686 = vpop.permute.xlu0 %685
        %v688 = vsub.f32 %v655, %v686
        %689 = vrot.lane.b32.xlu0 %v655, 123
        %v690 = vpop.permute.xlu0 %689
        %v692 = vmul.f32 %v655, %v690
        %v693 = vmul.f32 %v692, %v671
        %695 = vrot.lane.b32.xlu0 %v693, 120
        %v696 = vpop.permute.xlu0 %695
        %v698 = vsub.f32 %v655, %v696
        %699 = vrot.lane.b32.xlu0 %v655, 126
        %v700 = vpop.permute.xlu0 %699
        %v702 = vmul.f32 %v655, %v700
        %703 = vrot.lane.b32.xlu0 %v663, 11
        %v704 = vpop.permute.xlu0 %703
        %v706 = vmul.f32 %v702, %v704
        %708 = vrot.lane.b32.xlu0 %v706, 120
        %v709 = vpop.permute.xlu0 %708
        %v711 = vsub.f32 %v655, %v709
        %v712 = vmul.f32 %v668, %v704
        %714 = vrot.lane.b32.xlu0 %v712, 121
        %v715 = vpop.permute.xlu0 %714
        %v717 = vsub.f32 %v655, %v715
        %v718 = vmul.f32 %v682, %v704
        %720 = vrot.lane.b32.xlu0 %v718, 122
        %v721 = vpop.permute.xlu0 %720
        %v723 = vsub.f32 %v655, %v721
        %724 = vrot.lane.b32.xlu0 %v655, 127
        %v725 = vpop.permute.xlu0 %724
        %v727 = vmul.f32 %v655, %v725
        %728 = vrot.lane.b32.xlu0 %v663, 12
        %v729 = vpop.permute.xlu0 %728
        %v731 = vmul.f32 %v727, %v729
        %733 = vrot.lane.b32.xlu0 %v731, 122
        %v734 = vpop.permute.xlu0 %733
        %v736 = vsub.f32 %v655, %v734
        %v737 = vmul.f32 %v702, %v729
        %739 = vrot.lane.b32.xlu0 %v737, 123
        %v740 = vpop.permute.xlu0 %739
        %v742 = vsub.f32 %v655, %v740
        %v743 = vmul.f32 %v668, %v729
        %745 = vrot.lane.b32.xlu0 %v743, 124
        %v746 = vpop.permute.xlu0 %745
        %v748 = vsub.f32 %v655, %v746
        %v749 = vmul.f32 %v655, %v655
        %751 = vrot.lane.b32.xlu0 %v749, 127
        %v752 = vpop.permute.xlu0 %751
        %v754 = vadd.f32 %v749, %v752
        %755 = vrot.lane.b32.xlu0 %v749, 126
        %v756 = vpop.permute.xlu0 %755
        %v758 = vadd.f32 %v754, %v756
        %759 = vrot.lane.b32.xlu0 %v749, 125
        %v760 = vpop.permute.xlu0 %759
        %v762 = vadd.f32 %v758, %v760
        %763 = vrot.lane.b32.xlu0 %v749, 124
        %v764 = vpop.permute.xlu0 %763
        %v766 = vadd.f32 %v762, %v764
        %767 = vrot.lane.b32.xlu0 %v749, 123
        %v768 = vpop.permute.xlu0 %767
        %v770 = vadd.f32 %v766, %v768
        %v771 = vmul.f32 %v770, %v671
        %773 = vrot.lane.b32.xlu0 %v771, 127
        %v774 = vpop.permute.xlu0 %773
        %v776 = vsub.f32 %v655, %v774
        %v777 = vmax.f32 %v776, 1e-30
        %v778 = vrcp.pop %v777
        %v779 = vmul.f32 %v777, %v778
        %v780 = vsub.f32 2.0, %v779
        %v781 = vmul.f32 %v778, %v780
        %v782 = vmul.f32 %v781, 2.0
        %784 = vrot.lane.b32.xlu0 %v782, 119
        %v785 = vpop.permute.xlu0 %784
        %v787 = vmul.f32 %v678, %v785
        %788 = vrot.lane.b32.xlu0 %v782, 120
        %v789 = vpop.permute.xlu0 %788
        %v791 = vmul.f32 %v688, %v789
        %792 = vrot.lane.b32.xlu0 %v782, 121
        %v793 = vpop.permute.xlu0 %792
        %v795 = vmul.f32 %v698, %v793
        %796 = vrot.lane.b32.xlu0 %v782, 122
        %v797 = vpop.permute.xlu0 %796
        %v799 = vmul.f32 %v711, %v797
        %800 = vrot.lane.b32.xlu0 %v782, 123
        %v801 = vpop.permute.xlu0 %800
        %v803 = vmul.f32 %v717, %v801
        %804 = vrot.lane.b32.xlu0 %v782, 124
        %v805 = vpop.permute.xlu0 %804
        %v807 = vmul.f32 %v723, %v805
        %808 = vrot.lane.b32.xlu0 %v782, 125
        %v809 = vpop.permute.xlu0 %808
        %v811 = vmul.f32 %v736, %v809
        %812 = vrot.lane.b32.xlu0 %v782, 126
        %v813 = vpop.permute.xlu0 %812
        %v815 = vmul.f32 %v742, %v813
        %816 = vrot.lane.b32.xlu0 %v782, 127
        %v817 = vpop.permute.xlu0 %816
        %v819 = vmul.f32 %v748, %v817
        %v820 = vmul.f32 %v787, %v787
        %v821 = vmul.f32 %v791, %v791
        %823 = vrot.lane.b32.xlu0 %v821, 127
        %v824 = vpop.permute.xlu0 %823
        %v826 = vadd.f32 %v820, %v824
        %v827 = vmul.f32 %v795, %v795
        %829 = vrot.lane.b32.xlu0 %v827, 126
        %v830 = vpop.permute.xlu0 %829
        %v832 = vadd.f32 %v826, %v830
        %v833 = vmul.f32 %v799, %v799
        %835 = vrot.lane.b32.xlu0 %v833, 125
        %v836 = vpop.permute.xlu0 %835
        %v838 = vadd.f32 %v832, %v836
        %v839 = vmul.f32 %v803, %v803
        %841 = vrot.lane.b32.xlu0 %v839, 124
        %v842 = vpop.permute.xlu0 %841
        %v844 = vadd.f32 %v838, %v842
        %v845 = vmul.f32 %v807, %v807
        %847 = vrot.lane.b32.xlu0 %v845, 123
        %v848 = vpop.permute.xlu0 %847
        %v850 = vadd.f32 %v844, %v848
        %v851 = vmul.f32 %v811, %v811
        %853 = vrot.lane.b32.xlu0 %v851, 122
        %v854 = vpop.permute.xlu0 %853
        %v856 = vadd.f32 %v850, %v854
        %v857 = vmul.f32 %v815, %v815
        %859 = vrot.lane.b32.xlu0 %v857, 121
        %v860 = vpop.permute.xlu0 %859
        %v862 = vadd.f32 %v856, %v860
        %v863 = vmul.f32 %v819, %v819
        %865 = vrot.lane.b32.xlu0 %v863, 120
        %v866 = vpop.permute.xlu0 %865
        %v868 = vadd.f32 %v862, %v866
        %v869 = vmul.f32 %v868, -2.0
        %871 = vrot.lane.b32.xlu0 %v819, 124
        %v872 = vpop.permute.xlu0 %871
        %v874 = vmul.f32 %v803, %v872
        %876 = vrot.lane.b32.xlu0 %v815, 126
        %v877 = vpop.permute.xlu0 %876
        %v879 = vmul.f32 %v807, %v877
        %881 = vrot.lane.b32.xlu0 %v879, 127
        %v882 = vpop.permute.xlu0 %881
        %v884 = vsub.f32 %v874, %v882
        %886 = vrot.lane.b32.xlu0 %v884, 124
        %v887 = vpop.permute.xlu0 %886
        %v889 = vmul.f32 %v787, %v887
        %890 = vrot.lane.b32.xlu0 %v819, 123
        %v891 = vpop.permute.xlu0 %890
        %v893 = vmul.f32 %v799, %v891
        %895 = vrot.lane.b32.xlu0 %v811, 127
        %v896 = vpop.permute.xlu0 %895
        %v898 = vmul.f32 %v807, %v896
        %900 = vrot.lane.b32.xlu0 %v898, 126
        %v901 = vpop.permute.xlu0 %900
        %v903 = vsub.f32 %v893, %v901
        %905 = vrot.lane.b32.xlu0 %v903, 126
        %v906 = vpop.permute.xlu0 %905
        %v908 = vmul.f32 %v791, %v906
        %910 = vrot.lane.b32.xlu0 %v908, 127
        %v911 = vpop.permute.xlu0 %910
        %v913 = vsub.f32 %v889, %v911
        %914 = vrot.lane.b32.xlu0 %v815, 124
        %v915 = vpop.permute.xlu0 %914
        %v917 = vmul.f32 %v799, %v915
        %918 = vrot.lane.b32.xlu0 %v811, 126
        %v919 = vpop.permute.xlu0 %918
        %v921 = vmul.f32 %v803, %v919
        %923 = vrot.lane.b32.xlu0 %v921, 127
        %v924 = vpop.permute.xlu0 %923
        %v926 = vsub.f32 %v917, %v924
        %928 = vrot.lane.b32.xlu0 %v926, 127
        %v929 = vpop.permute.xlu0 %928
        %v931 = vmul.f32 %v795, %v929
        %933 = vrot.lane.b32.xlu0 %v931, 126
        %v934 = vpop.permute.xlu0 %933
        %v936 = vadd.f32 %v913, %v934
        %v937 = vmul.f32 %v936, -8.0
        %939 = vrot.lane.b32.xlu0 %v803, 124
        %v940 = vpop.permute.xlu0 %939
        %v942 = vadd.f32 %v787, %v940
        %943 = vrot.lane.b32.xlu0 %v819, 120
        %v944 = vpop.permute.xlu0 %943
        %v946 = vadd.f32 %v942, %v944
        %v947 = vsub.f32 %v807, %v877
        %949 = vrot.lane.b32.xlu0 %v795, 4
        %v950 = vpop.permute.xlu0 %949
        %v952 = vsub.f32 %v811, %v950
        %954 = vrot.lane.b32.xlu0 %v799, 126
        %v955 = vpop.permute.xlu0 %954
        %v957 = vsub.f32 %v791, %v955
        %v958 = vsub.f32 %v787, %v940
        %v959 = vsub.f32 %v958, %v944
        %v960 = vadd.f32 %v791, %v955
        %v961 = vadd.f32 %v811, %v950
        %v962 = vsub.f32 0.0, %v787
        %v963 = vadd.f32 %v962, %v940
        %v964 = vsub.f32 %v963, %v944
        %v965 = vadd.f32 %v807, %v877
        %v966 = vsub.f32 %v962, %v940
        %v967 = vadd.f32 %v966, %v944
        %v968 = vmul.f32 %v964, %v967
        %v969 = vmul.f32 %v965, %v965
        %971 = vrot.lane.b32.xlu0 %v969, 123
        %v972 = vpop.permute.xlu0 %971
        %v974 = vsub.f32 %v968, %v972
        %v975 = vmul.f32 %v959, %v974
        %977 = vrot.lane.b32.xlu0 %v967, 1
        %v978 = vpop.permute.xlu0 %977
        %v980 = vmul.f32 %v960, %v978
        %982 = vrot.lane.b32.xlu0 %v961, 127
        %v983 = vpop.permute.xlu0 %982
        %v985 = vmul.f32 %v965, %v983
        %987 = vrot.lane.b32.xlu0 %v985, 124
        %v988 = vpop.permute.xlu0 %987
        %v990 = vsub.f32 %v980, %v988
        %v991 = vmul.f32 %v960, %v990
        %993 = vrot.lane.b32.xlu0 %v991, 127
        %v994 = vpop.permute.xlu0 %993
        %v996 = vsub.f32 %v975, %v994
        %998 = vrot.lane.b32.xlu0 %v965, 124
        %v999 = vpop.permute.xlu0 %998
        %v1001 = vmul.f32 %v960, %v999
        %1002 = vrot.lane.b32.xlu0 %v961, 122
        %v1003 = vpop.permute.xlu0 %1002
        %v1005 = vmul.f32 %v964, %v1003
        %1007 = vrot.lane.b32.xlu0 %v1005, 1
        %v1008 = vpop.permute.xlu0 %1007
        %v1010 = vsub.f32 %v1001, %v1008
        %1012 = vrot.lane.b32.xlu0 %v1010, 5
        %v1013 = vpop.permute.xlu0 %1012
        %v1015 = vmul.f32 %v961, %v1013
        %1017 = vrot.lane.b32.xlu0 %v1015, 122
        %v1018 = vpop.permute.xlu0 %1017
        %v1020 = vadd.f32 %v996, %v1018
        %v1021 = vmul.f32 %v946, %v1020
        %1023 = vrot.lane.b32.xlu0 %v974, 5
        %v1024 = vpop.permute.xlu0 %1023
        %v1026 = vmul.f32 %v947, %v1024
        %1027 = vrot.lane.b32.xlu0 %v967, 6
        %v1028 = vpop.permute.xlu0 %1027
        %v1030 = vmul.f32 %v952, %v1028
        %1032 = vrot.lane.b32.xlu0 %v957, 4
        %v1033 = vpop.permute.xlu0 %1032
        %v1035 = vmul.f32 %v965, %v1033
        %1037 = vrot.lane.b32.xlu0 %v1035, 1
        %v1038 = vpop.permute.xlu0 %1037
        %v1040 = vsub.f32 %v1030, %v1038
        %1042 = vrot.lane.b32.xlu0 %v1040, 123
        %v1043 = vpop.permute.xlu0 %1042
        %v1045 = vmul.f32 %v960, %v1043
        %1047 = vrot.lane.b32.xlu0 %v1045, 4
        %v1048 = vpop.permute.xlu0 %1047
        %v1050 = vsub.f32 %v1026, %v1048
        %1051 = vrot.lane.b32.xlu0 %v965, 1
        %v1052 = vpop.permute.xlu0 %1051
        %v1054 = vmul.f32 %v952, %v1052
        %1055 = vrot.lane.b32.xlu0 %v957, 127
        %v1056 = vpop.permute.xlu0 %1055
        %v1058 = vmul.f32 %v964, %v1056
        %1060 = vrot.lane.b32.xlu0 %v1058, 6
        %v1061 = vpop.permute.xlu0 %1060
        %v1063 = vsub.f32 %v1054, %v1061
        %v1064 = vmul.f32 %v961, %v1063
        %1066 = vrot.lane.b32.xlu0 %v1064, 127
        %v1067 = vpop.permute.xlu0 %1066
        %v1069 = vadd.f32 %v1050, %v1067
        %v1070 = vmul.f32 %v947, %v1069
        %1072 = vrot.lane.b32.xlu0 %v1070, 123
        %v1073 = vpop.permute.xlu0 %1072
        %v1075 = vsub.f32 %v1021, %v1073
        %1077 = vrot.lane.b32.xlu0 %v990, 4
        %v1078 = vpop.permute.xlu0 %1077
        %v1080 = vmul.f32 %v947, %v1078
        %1081 = vrot.lane.b32.xlu0 %v1040, 122
        %v1082 = vpop.permute.xlu0 %1081
        %v1084 = vmul.f32 %v959, %v1082
        %1086 = vrot.lane.b32.xlu0 %v1084, 5
        %v1087 = vpop.permute.xlu0 %1086
        %v1089 = vsub.f32 %v1080, %v1087
        %v1090 = vmul.f32 %v952, %v961
        %v1091 = vmul.f32 %v960, %v957
        %1093 = vrot.lane.b32.xlu0 %v1091, 5
        %v1094 = vpop.permute.xlu0 %1093
        %v1096 = vsub.f32 %v1090, %v1094
        %v1097 = vmul.f32 %v961, %v1096
        %1099 = vrot.lane.b32.xlu0 %v1097, 127
        %v1100 = vpop.permute.xlu0 %1099
        %v1102 = vadd.f32 %v1089, %v1100
        %1104 = vrot.lane.b32.xlu0 %v1102, 1
        %v1105 = vpop.permute.xlu0 %1104
        %v1107 = vmul.f32 %v952, %v1105
        %1109 = vrot.lane.b32.xlu0 %v1107, 122
        %v1110 = vpop.permute.xlu0 %1109
        %v1112 = vadd.f32 %v1075, %v1110
        %1113 = vrot.lane.b32.xlu0 %v1010, 4
        %v1114 = vpop.permute.xlu0 %1113
        %v1116 = vmul.f32 %v947, %v1114
        %1118 = vrot.lane.b32.xlu0 %v1063, 122
        %v1119 = vpop.permute.xlu0 %1118
        %v1121 = vmul.f32 %v959, %v1119
        %1123 = vrot.lane.b32.xlu0 %v1121, 5
        %v1124 = vpop.permute.xlu0 %1123
        %v1126 = vsub.f32 %v1116, %v1124
        %1128 = vrot.lane.b32.xlu0 %v1096, 123
        %v1129 = vpop.permute.xlu0 %1128
        %v1131 = vmul.f32 %v960, %v1129
        %1133 = vrot.lane.b32.xlu0 %v1131, 4
        %v1134 = vpop.permute.xlu0 %1133
        %v1136 = vadd.f32 %v1126, %v1134
        %1138 = vrot.lane.b32.xlu0 %v1136, 124
        %v1139 = vpop.permute.xlu0 %1138
        %v1141 = vmul.f32 %v957, %v1139
        %1143 = vrot.lane.b32.xlu0 %v1141, 127
        %v1144 = vpop.permute.xlu0 %1143
        %v1146 = vsub.f32 %v1112, %v1144
        %v1147 = vadd.f32 %v869, 1.0
        %v1148 = vadd.f32 %v1147, %v937
        %v1149 = vadd.f32 %v1148, %v1146
        %v1150 = vadd.f32 %v1147, 2.0
        %v1151 = vadd.f32 %v1150, %v1148
        %v1152 = vand.u32 2147483647, %v1151
        %vm1153 = vcmp.gt.f32.partialorder %v1152, 1e-08
        %vm1154 = vcmp.ge.f32.partialorder %v1151, 0.0
        %v1155 = vsel %vm1154, 1e-08, -1e-08
        %v1156 = vsel %vm1153, %v1151, %v1155
        %v1157 = vrcp.pop %v1156
        %v1158 = vmul.f32 %v1149, %v1157
        %v1159 = vsub.f32 1.0, %v1158
        %v1160 = vmul.f32 %v1159, %v1159
        %v1161 = vadd.f32 %v1160, %v869
        %v1162 = vmul.f32 %v1161, %v1159
        %v1163 = vadd.f32 %v1162, %v937
        %v1164 = vmul.f32 %v1163, %v1159
        %v1165 = vadd.f32 %v1164, %v1146
        %v1166 = vmul.f32 %v1160, 2.0
        %v1167 = vmul.f32 %v1166, %v1159
        %v1168 = vadd.f32 %v1167, %v1162
        %v1169 = vadd.f32 %v1168, %v1163
        %v1170 = vand.u32 2147483647, %v1169
        %vm1171 = vcmp.gt.f32.partialorder %v1170, 1e-08
        %vm1172 = vcmp.ge.f32.partialorder %v1169, 0.0
        %v1173 = vsel %vm1172, 1e-08, -1e-08
        %v1174 = vsel %vm1171, %v1169, %v1173
        %v1175 = vrcp.pop %v1174
        %v1176 = vmul.f32 %v1165, %v1175
        %v1177 = vsub.f32 %v1159, %v1176
        %v1178 = vmul.f32 %v1177, %v1177
        %v1179 = vadd.f32 %v1178, %v869
        %v1180 = vmul.f32 %v1179, %v1177
        %v1181 = vadd.f32 %v1180, %v937
        %v1182 = vmul.f32 %v1181, %v1177
        %v1183 = vadd.f32 %v1182, %v1146
        %v1184 = vmul.f32 %v1178, 2.0
        %v1185 = vmul.f32 %v1184, %v1177
        %v1186 = vadd.f32 %v1185, %v1180
        %v1187 = vadd.f32 %v1186, %v1181
        %v1188 = vand.u32 2147483647, %v1187
        %vm1189 = vcmp.gt.f32.partialorder %v1188, 1e-08
        %vm1190 = vcmp.ge.f32.partialorder %v1187, 0.0
        %v1191 = vsel %vm1190, 1e-08, -1e-08
        %v1192 = vsel %vm1189, %v1187, %v1191
        %v1193 = vrcp.pop %v1192
        %v1194 = vmul.f32 %v1183, %v1193
        %v1195 = vsub.f32 %v1177, %v1194
        %v1196 = vmul.f32 %v1195, %v1195
        %v1197 = vadd.f32 %v1196, %v869
        %v1198 = vmul.f32 %v1197, %v1195
        %v1199 = vadd.f32 %v1198, %v937
        %v1200 = vmul.f32 %v1199, %v1195
        %v1201 = vadd.f32 %v1200, %v1146
        %v1202 = vmul.f32 %v1196, 2.0
        %v1203 = vmul.f32 %v1202, %v1195
        %v1204 = vadd.f32 %v1203, %v1198
        %v1205 = vadd.f32 %v1204, %v1199
        %v1206 = vand.u32 2147483647, %v1205
        %vm1207 = vcmp.gt.f32.partialorder %v1206, 1e-08
        %vm1208 = vcmp.ge.f32.partialorder %v1205, 0.0
        %v1209 = vsel %vm1208, 1e-08, -1e-08
        %v1210 = vsel %vm1207, %v1205, %v1209
        %v1211 = vrcp.pop %v1210
        %v1212 = vmul.f32 %v1201, %v1211
        %v1213 = vsub.f32 %v1195, %v1212
        %v1214 = vmul.f32 %v1213, %v1213
        %v1215 = vadd.f32 %v1214, %v869
        %v1216 = vmul.f32 %v1215, %v1213
        %v1217 = vadd.f32 %v1216, %v937
        %v1218 = vmul.f32 %v1217, %v1213
        %v1219 = vadd.f32 %v1218, %v1146
        %v1220 = vmul.f32 %v1214, 2.0
        %v1221 = vmul.f32 %v1220, %v1213
        %v1222 = vadd.f32 %v1221, %v1216
        %v1223 = vadd.f32 %v1222, %v1217
        %v1224 = vand.u32 2147483647, %v1223
        %vm1225 = vcmp.gt.f32.partialorder %v1224, 1e-08
        %vm1226 = vcmp.ge.f32.partialorder %v1223, 0.0
        %v1227 = vsel %vm1226, 1e-08, -1e-08
        %v1228 = vsel %vm1225, %v1223, %v1227
        %v1229 = vrcp.pop %v1228
        %v1230 = vmul.f32 %v1219, %v1229
        %v1231 = vsub.f32 %v1213, %v1230
        %v1232 = vmul.f32 %v1231, %v1231
        %v1233 = vadd.f32 %v1232, %v869
        %v1234 = vmul.f32 %v1233, %v1231
        %v1235 = vadd.f32 %v1234, %v937
        %v1236 = vmul.f32 %v1235, %v1231
        %v1237 = vadd.f32 %v1236, %v1146
        %v1238 = vmul.f32 %v1232, 2.0
        %v1239 = vmul.f32 %v1238, %v1231
        %v1240 = vadd.f32 %v1239, %v1234
        %v1241 = vadd.f32 %v1240, %v1235
        %v1242 = vand.u32 2147483647, %v1241
        %vm1243 = vcmp.gt.f32.partialorder %v1242, 1e-08
        %vm1244 = vcmp.ge.f32.partialorder %v1241, 0.0
        %v1245 = vsel %vm1244, 1e-08, -1e-08
        %v1246 = vsel %vm1243, %v1241, %v1245
        %v1247 = vrcp.pop %v1246
        %v1248 = vmul.f32 %v1237, %v1247
        %v1249 = vsub.f32 %v1231, %v1248
        %v1250 = vmul.f32 %v1249, %v1249
        %v1251 = vadd.f32 %v1250, %v869
        %v1252 = vmul.f32 %v1251, %v1249
        %v1253 = vadd.f32 %v1252, %v937
        %v1254 = vmul.f32 %v1253, %v1249
        %v1255 = vadd.f32 %v1254, %v1146
        %v1256 = vmul.f32 %v1250, 2.0
        %v1257 = vmul.f32 %v1256, %v1249
        %v1258 = vadd.f32 %v1257, %v1252
        %v1259 = vadd.f32 %v1258, %v1253
        %v1260 = vand.u32 2147483647, %v1259
        %vm1261 = vcmp.gt.f32.partialorder %v1260, 1e-08
        %vm1262 = vcmp.ge.f32.partialorder %v1259, 0.0
        %v1263 = vsel %vm1262, 1e-08, -1e-08
        %v1264 = vsel %vm1261, %v1259, %v1263
        %v1265 = vrcp.pop %v1264
        %v1266 = vmul.f32 %v1255, %v1265
        %v1267 = vsub.f32 %v1249, %v1266
        %v1268 = vmul.f32 %v1267, %v1267
        %v1269 = vadd.f32 %v1268, %v869
        %v1270 = vmul.f32 %v1269, %v1267
        %v1271 = vadd.f32 %v1270, %v937
        %v1272 = vmul.f32 %v1271, %v1267
        %v1273 = vadd.f32 %v1272, %v1146
        %v1274 = vmul.f32 %v1268, 2.0
        %v1275 = vmul.f32 %v1274, %v1267
        %v1276 = vadd.f32 %v1275, %v1270
        %v1277 = vadd.f32 %v1276, %v1271
        %v1278 = vand.u32 2147483647, %v1277
        %vm1279 = vcmp.gt.f32.partialorder %v1278, 1e-08
        %vm1280 = vcmp.ge.f32.partialorder %v1277, 0.0
        %v1281 = vsel %vm1280, 1e-08, -1e-08
        %v1282 = vsel %vm1279, %v1277, %v1281
        %v1283 = vrcp.pop %v1282
        %v1284 = vmul.f32 %v1273, %v1283
        %v1285 = vsub.f32 %v1267, %v1284
        %v1286 = vmul.f32 %v1285, %v1285
        %v1287 = vadd.f32 %v1286, %v869
        %v1288 = vmul.f32 %v1287, %v1285
        %v1289 = vadd.f32 %v1288, %v937
        %v1290 = vmul.f32 %v1289, %v1285
        %v1291 = vadd.f32 %v1290, %v1146
        %v1292 = vmul.f32 %v1286, 2.0
        %v1293 = vmul.f32 %v1292, %v1285
        %v1294 = vadd.f32 %v1293, %v1288
        %v1295 = vadd.f32 %v1294, %v1289
        %v1296 = vand.u32 2147483647, %v1295
        %vm1297 = vcmp.gt.f32.partialorder %v1296, 1e-08
        %vm1298 = vcmp.ge.f32.partialorder %v1295, 0.0
        %v1299 = vsel %vm1298, 1e-08, -1e-08
        %v1300 = vsel %vm1297, %v1295, %v1299
        %v1301 = vrcp.pop %v1300
        %v1302 = vmul.f32 %v1291, %v1301
        %v1303 = vsub.f32 %v1285, %v1302
        %v1304 = vmul.f32 %v1303, %v1303
        %v1305 = vadd.f32 %v1304, %v869
        %v1306 = vmul.f32 %v1305, %v1303
        %v1307 = vadd.f32 %v1306, %v937
        %v1308 = vmul.f32 %v1307, %v1303
        %v1309 = vadd.f32 %v1308, %v1146
        %v1310 = vmul.f32 %v1304, 2.0
        %v1311 = vmul.f32 %v1310, %v1303
        %v1312 = vadd.f32 %v1311, %v1306
        %v1313 = vadd.f32 %v1312, %v1307
        %v1314 = vand.u32 2147483647, %v1313
        %vm1315 = vcmp.gt.f32.partialorder %v1314, 1e-08
        %vm1316 = vcmp.ge.f32.partialorder %v1313, 0.0
        %v1317 = vsel %vm1316, 1e-08, -1e-08
        %v1318 = vsel %vm1315, %v1313, %v1317
        %v1319 = vrcp.pop %v1318
        %v1320 = vmul.f32 %v1309, %v1319
        %v1321 = vsub.f32 %v1303, %v1320
        %v1322 = vmul.f32 %v1321, %v1321
        %v1323 = vadd.f32 %v1322, %v869
        %v1324 = vmul.f32 %v1323, %v1321
        %v1325 = vadd.f32 %v1324, %v937
        %v1326 = vmul.f32 %v1325, %v1321
        %v1327 = vadd.f32 %v1326, %v1146
        %v1328 = vmul.f32 %v1322, 2.0
        %v1329 = vmul.f32 %v1328, %v1321
        %v1330 = vadd.f32 %v1329, %v1324
        %v1331 = vadd.f32 %v1330, %v1325
        %v1332 = vand.u32 2147483647, %v1331
        %vm1333 = vcmp.gt.f32.partialorder %v1332, 1e-08
        %vm1334 = vcmp.ge.f32.partialorder %v1331, 0.0
        %v1335 = vsel %vm1334, 1e-08, -1e-08
        %v1336 = vsel %vm1333, %v1331, %v1335
        %v1337 = vrcp.pop %v1336
        %v1338 = vmul.f32 %v1327, %v1337
        %v1339 = vsub.f32 %v1321, %v1338
        %v1340 = vmul.f32 %v1339, %v1339
        %v1341 = vadd.f32 %v1340, %v869
        %v1342 = vmul.f32 %v1341, %v1339
        %v1343 = vadd.f32 %v1342, %v937
        %v1344 = vmul.f32 %v1343, %v1339
        %v1345 = vadd.f32 %v1344, %v1146
        %v1346 = vmul.f32 %v1340, 2.0
        %v1347 = vmul.f32 %v1346, %v1339
        %v1348 = vadd.f32 %v1347, %v1342
        %v1349 = vadd.f32 %v1348, %v1343
        %v1350 = vand.u32 2147483647, %v1349
        %vm1351 = vcmp.gt.f32.partialorder %v1350, 1e-08
        %vm1352 = vcmp.ge.f32.partialorder %v1349, 0.0
        %v1353 = vsel %vm1352, 1e-08, -1e-08
        %v1354 = vsel %vm1351, %v1349, %v1353
        %v1355 = vrcp.pop %v1354
        %v1356 = vmul.f32 %v1345, %v1355
        %v1357 = vsub.f32 %v1339, %v1356
        %v1358 = vsub.f32 1.0, %v1357
        %1360 = vrot.lane.b32.xlu0 %v1358, 9
        %v1361 = vpop.permute.xlu0 %1360
        %v1363 = vmul.f32 %v776, %v1361
        %v1364 = vmax.f32 %v1363, 0.0
        %1365 = vrot.lane.b32.xlu0 %v663, 9
        %v1366 = vpop.permute.xlu0 %1365
        %v1368 = vmul.f32 %v1364, %v1366
        %1370 = vset.pattern.permute.xlu0 9
        %1371 = vperm.xlu0 %1370, %v1368
        %v1372 = vpop.permute.xlu0 %1371
        %1374 = vst [vmem:[%s296] sm:$0xff] %v1372
      $region40: #{coords2rmsd.2} parent=31 // pred_fallthru
        _
      %p1375 = scmp.lt.s32.totalorder %s21, 1
      %s1376 = scalar_select %p1375, %s21, 1
      %s1377 = smul.addr %s1376, 8
      %s1378 = scalar_lea.vmem %s4, %s1377
      // Predicated region
      $region41: #{coords2rmsd.2} parent=31 // pred_check
        %p1379 = pneg %p129
      $region42: #{coords2rmsd.2} parent=31 // pred_check_branch
        %1381 = sbr.rel (%p1379) target = $region44
      $region43: #{coords2rmsd.2} parent=31 // pred_region
        _
      $region44: #{coords2rmsd.2} parent=31 // pred_fallthru
        _
    $region32: #{coords2rmsd.2} parent=5 // pred_fallthru
      _
    %p1382 = scmp.le.s32.totalorder 2, %s12
    // Predicated region
    $region45: #{coords2rmsd.2} parent=5 // pred_check
      %p1383 = pneg %p1382
    $region46: #{coords2rmsd.2} parent=5 // pred_check_branch
      %1385 = sbr.rel (%p1383) target = $region48
    $region47: #{coords2rmsd.2} parent=5 // pred_region
      %s1386 = ssub.s32 %s12, 2
      // Predicated region
      $region49: #{coords2rmsd.2} parent=47 // pred_check
        %p1387 = pneg %p135
      $region50: #{coords2rmsd.2} parent=47 // pred_check_branch
        %1389 = sbr.rel (%p1387) target = $region52
      $region51: #{coords2rmsd.2} parent=47 // pred_region
        %p1390 = scmp.lt.s32.totalorder %s23, 1
        %s1391 = scalar_select %p1390, %s23, 1
        %s1392 = smul.addr %s1391, 8
        %s1393 = scalar_lea.vmem %s4, %s1392
      $region52: #{coords2rmsd.2} parent=47 // pred_fallthru
        _
    $region48: #{coords2rmsd.2} parent=5 // pred_fallthru
      _
  $region6: #{coords2rmsd.2} parent=0 // loop_footer
    %s16 = sadd.s32 1, %s12
  $region7: #{coords2rmsd.2} parent=0 // loop_footer_branch
    %11 = sbr.rel target = $region3
  $region8: #{coords2rmsd.2} parent=0 // loop_exit
    _

</llo_original>
